<compile_context>
chip_gen: v5e
topology: v5e:2x2
jax: 0.10.0
libtpu: 0.0.40
codegen_flags: <defaults>
</compile_context>

<pallas_src>
import functools

import jax
import jax.numpy as jnp
from jax import lax
from jax.experimental import pallas as pl
from jax.experimental.pallas import tpu as pltpu

HIDDEN = 32          # hidden_dim
NUM_HEADS = 4        # num_heads  -> hidden_dim * num_heads = 128
NUM_LAYERS = 2
CUTOFF = 1.8         # cutoff_distance
OUT_DIM = 128        # final readout width
LN_EPS = 1e-5


def _silu(x):
    return x * jax.nn.sigmoid(x)


def _layer_norm(x, gamma, beta):
    mu = jnp.mean(x, axis=-1, keepdims=True)
    var = jnp.mean((x - mu) ** 2, axis=-1, keepdims=True)
    return (x - mu) * lax.rsqrt(var + LN_EPS) * gamma + beta


# -----------------------------------------------------------------------------
# Fused kernel: embedding + NUM_LAYERS equivariant layers + readout MLP
# -----------------------------------------------------------------------------
def se3_fused_kernel(
    paug_ref,       # [N, 4]   f32  [pos | 1]
    posz_ref,       # [N, 4]   f32  [pos | 0]
    f_ref,          # [N, 10]  f32  monomials [x,y,z,xx,xy,xz,yy,yz,zz,1]
    ft_ref,         # [10, N]  f32  transpose of f (built in wrapper)
    bcol_ref,       # [N, 1]   i32
    brow_ref,       # [1, N]   i32
    embw_ref,       # [4, hidden]        (emb_w ; emb_b)
    cmat_ref,       # [10*L*H, 10]       folded per-(layer,head) score quadratic forms
    dmat_ref,       # [10, 10]           dist^2 quadratic form
    wcomb_ref,      # [L*4*H, hidden]    per-(layer,head) (Wv_h@Wout_h rows ; bv_h@Wout_h)
    bout_ref,       # [L, hidden]
    g1_ref, b1_ref,  # [L, hidden]  inner LayerNorm (EquivariantLayer.norm)
    g2_ref, b2_ref,  # [L, hidden]  outer layer_norm[i]
    w1_ref, b1o_ref, w2_ref, b2o_ref,   # readout MLP
    out_ref,        # [B, OUT_DIM]
    *, num_layers, num_heads, cutoff, num_batches,
):
    n = paug_ref.shape[0]
    hidden = bout_ref.shape[1]

    paug = paug_ref[...]
    posz = posz_ref[...]
    f = f_ref[...]
    ft = ft_ref[...]

    # ---- layer-invariant geometry (MXU): dist^2 = F @ D @ F^T ---------------
    dist2 = jnp.dot(
        jnp.dot(f, dmat_ref[...], preferred_element_type=jnp.float32),
        ft, preferred_element_type=jnp.float32)                              # [N,N]

    # radius_graph(positions, r=cutoff, batch=batch, loop=False) as dense mask.
    same_batch = bcol_ref[...] == brow_ref[...]                              # [N,N]
    dd = lax.broadcasted_iota(jnp.int32, (n, n), 0)
    ss = lax.broadcasted_iota(jnp.int32, (n, n), 1)
    mask = jnp.logical_and(same_batch, dd != ss)
    mask = jnp.logical_and(mask, dist2 <= cutoff * cutoff)
    mask_f = jnp.where(mask, 1.0, 0.0).astype(jnp.float32)
    cnt = jnp.maximum(jnp.sum(mask_f, axis=-1, keepdims=True), 1.0)          # [N,1]
    inv_cnt = 1.0 / cnt

    # embedding(positions):  [pos|1] @ (emb_w ; emb_b)
    feats = jnp.dot(paug, embw_ref[...], preferred_element_type=jnp.float32)  # [N,hidden]

    for l in range(num_layers):
        # Per-head attention scores as Gram-matrix quadratic forms on the MXU:
        #   score_h[d,s] = q_h(rel)·k_h(rel)/sqrt(D) = F[d] @ C_h @ F[s]^T
        scores = []
        for h in range(num_heads):
            r = l * num_heads + h
            fc = jnp.dot(f, cmat_ref[10 * r:10 * (r + 1), :],
                         preferred_element_type=jnp.float32)                 # [N,10]
            scores.append(jnp.dot(fc, ft, preferred_element_type=jnp.float32))

        # softmax over the *head* axis (torch.softmax(attn_scores, dim=-1) on [E,H]).
        m = scores[0]
        for sc in scores[1:]:
            m = jnp.maximum(m, sc)
        exps = [jnp.exp(sc - m) for sc in scores]
        denom = exps[0]
        for e in exps[1:]:
            denom = denom + e
        minv = mask_f * pl.reciprocal(denom, approx=True)                    # [N,N]

        # TODO(synk): nn.Dropout(p=0.5) on attention weights is identity here
        # (eval-mode semantics); training-mode RNG dropout is not reproduced.

        # V + linear_out folded through the masked scatter-mean, all on the MXU:
        #   S_h = mw_h @ [pos|1];  S_h[:, :3] -= pos_d * t_h;
        #   acc += S_h @ (Wv_h@Wout_h ; bv_h@Wout_h)
        acc = jnp.zeros((n, hidden), jnp.float32)
        for h in range(num_heads):
            mw = exps[h] * minv                                              # [N,N]
            s_h = jnp.dot(mw, paug, preferred_element_type=jnp.float32)      # [N,4]
            s_h = s_h - posz * s_h[:, 3:4]      # rel = pos_s - pos_d correction
            base = (l * num_heads + h) * 4
            acc = acc + jnp.dot(s_h, wcomb_ref[base:base + 4, :],
                                preferred_element_type=jnp.float32)          # [N,hidden]

        upd = acc * inv_cnt + bout_ref[l:l + 1, :]
        upd = _layer_norm(upd, g1_ref[l:l + 1, :], b1_ref[l:l + 1, :])
        upd = _silu(upd)
        # SE3Transformer body: features = LayerNorm_l(features + updated_positions)
        feats = _layer_norm(feats + upd, g2_ref[l:l + 1, :], b2_ref[l:l + 1, :])

    # ---- readout: per-molecule mean pooling + Linear -> SiLU -> Linear ------
    bid = lax.broadcasted_iota(jnp.int32, (num_batches, n), 0)
    onehot = jnp.where(bid == brow_ref[...], 1.0, 0.0).astype(jnp.float32)   # [B,N]
    sums = jnp.dot(onehot, feats, preferred_element_type=jnp.float32)        # [B,hidden]
    bcnt = jnp.maximum(jnp.sum(onehot, axis=-1, keepdims=True), 1.0)
    rep = sums / bcnt

    hmid = _silu(
        jnp.dot(rep, w1_ref[...], preferred_element_type=jnp.float32) + b1o_ref[...])
    out_ref[...] = (
        jnp.dot(hmid, w2_ref[...], preferred_element_type=jnp.float32) + b2o_ref[...])


# -----------------------------------------------------------------------------
# Parameters (deterministic, synthetic) and weight folding
# -----------------------------------------------------------------------------
def init_params(key):
    hd = HIDDEN * NUM_HEADS

    def xavier(k, shape):
        fan_in, fan_out = shape
        bound = (6.0 / (fan_in + fan_out)) ** 0.5
        return jax.random.uniform(k, shape, jnp.float32, -bound, bound)

    def lin_bias(k, fan_in, width):
        bound = 1.0 / (fan_in ** 0.5)
        return jax.random.uniform(k, (1, width), jnp.float32, -bound, bound)

    keys = iter(jax.random.split(key, 64))
    params = {
        "emb_w": xavier(next(keys), (3, HIDDEN)),
        "emb_b": lin_bias(next(keys), 3, HIDDEN),
        "out_w1": xavier(next(keys), (HIDDEN, HIDDEN)),
        "out_b1": lin_bias(next(keys), HIDDEN, HIDDEN),
        "out_w2": xavier(next(keys), (HIDDEN, OUT_DIM)),
        "out_b2": lin_bias(next(keys), HIDDEN, OUT_DIM),
        "layers": [],
    }
    for _ in range(NUM_LAYERS):
        params["layers"].append({
            "wq": xavier(next(keys), (3, hd)), "bq": lin_bias(next(keys), 3, hd),
            "wk": xavier(next(keys), (3, hd)), "bk": lin_bias(next(keys), 3, hd),
            "wv": xavier(next(keys), (3, hd)), "bv": lin_bias(next(keys), 3, hd),
            "wout": xavier(next(keys), (hd, HIDDEN)),
            "bout": lin_bias(next(keys), hd, HIDDEN),
            "g1": jnp.ones((1, HIDDEN), jnp.float32),
            "b1": jnp.zeros((1, HIDDEN), jnp.float32),
            "g2": jnp.ones((1, HIDDEN), jnp.float32),
            "b2": jnp.zeros((1, HIDDEN), jnp.float32),
        })
    return params


def _dist2_qform():
    """10x10 D with F_d @ D @ F_s^T = |pos_s - pos_d|^2 for F=[x,y,z,xx,xy,xz,yy,yz,zz,1]."""
    D = jnp.zeros((10, 10), jnp.float32)
    D = D.at[0, 0].set(-2.0).at[1, 1].set(-2.0).at[2, 2].set(-2.0)
    D = D.at[3, 9].set(1.0).at[6, 9].set(1.0).at[8, 9].set(1.0)
    D = D.at[9, 3].set(1.0).at[9, 6].set(1.0).at[9, 8].set(1.0)
    return D


def _fold_layer_params(lp, num_heads, hidden_dim):
    """Fold (Wq,bq,Wk,bk) into per-head 10x10 score quadratic forms C_h (so that
    score_h = F @ C_h @ F^T with rel = pos_s - pos_d), and (Wv,bv,Wout) into a
    [4H, hidden] projection (exact in real arithmetic)."""
    inv_sqrt_d = 1.0 / (hidden_dim ** 0.5)
    bq, bk, bv = lp["bq"][0], lp["bk"][0], lp["bv"][0]
    cmats, wrows = [], []
    for h in range(num_heads):
        sl = slice(h * hidden_dim, (h + 1) * hidden_dim)
        wq_h, wk_h, wv_h = lp["wq"][:, sl], lp["wk"][:, sl], lp["wv"][:, sl]
        bq_h, bk_h, bv_h = bq[sl], bk[sl], bv[sl]
        wout_h = lp["wout"][sl, :]                                    # [D, hidden]

        M = wq_h @ wk_h.T                                             # [3, 3]
        Msym = M + M.T
        c = wq_h @ bk_h + wk_h @ bq_h                                 # [3]
        k0 = jnp.sum(bq_h * bk_h)
        # quadratic-monomial coefficients of v^T M v in order xx,xy,xz,yy,yz,zz
        quad = jnp.stack([M[0, 0], Msym[0, 1], Msym[0, 2],
                          M[1, 1], Msym[1, 2], M[2, 2]])

        C = jnp.zeros((10, 10), jnp.float32)
        C = C.at[0:3, 0:3].set(-Msym)        # -d^T (M+M^T) s
        C = C.at[3:9, 9].set(quad)           #  d^T M d
        C = C.at[9, 3:9].set(quad)           #  s^T M s
        C = C.at[0:3, 9].set(-c)             # -d^T c
        C = C.at[9, 0:3].set(c)              #  s^T c
        C = C.at[9, 9].set(k0)               #  bq·bk
        cmats.append(C * inv_sqrt_d)

        wrows.append(jnp.concatenate(
            [wv_h @ wout_h, (bv_h @ wout_h)[None, :]], axis=0))       # [4, hidden]
    cmat = jnp.concatenate(cmats, axis=0)                             # [10H, 10]
    wcomb = jnp.concatenate(wrows, axis=0)                            # [4H, hidden]
    return cmat.astype(jnp.float32), wcomb.astype(jnp.float32)


# -----------------------------------------------------------------------------
# Forward wrapper (single pallas_call)
# -----------------------------------------------------------------------------
def se3_transformer_forward(positions, batch_indices, params, num_batches):
    n = positions.shape[0]
    pos = positions.astype(jnp.float32)
    x, y, z = pos[:, 0:1], pos[:, 1:2], pos[:, 2:3]
    ones = jnp.ones((n, 1), jnp.float32)
    zeros = jnp.zeros((n, 1), jnp.float32)
    # per-atom monomial features and layouts (built in XLA; no in-kernel transposes)
    f = jnp.concatenate([x, y, z, x * x, x * y, x * z, y * y, y * z, z * z, ones],
                        axis=-1)                                  # [N, 10]
    ft = jnp.transpose(f)                                         # [10, N]
    paug = jnp.concatenate([pos, ones], axis=-1)                  # [N, 4]
    posz = jnp.concatenate([pos, zeros], axis=-1)                 # [N, 4]
    bcol = batch_indices.reshape(n, 1).astype(jnp.int32)
    brow = batch_indices.reshape(1, n).astype(jnp.int32)

    embw = jnp.concatenate([params["emb_w"], params["emb_b"]], axis=0)   # [4, hidden]
    dmat = _dist2_qform()

    cmats, wcombs, bouts, g1s, b1s, g2s, b2s = [], [], [], [], [], [], []
    for lp in params["layers"]:
        c, w = _fold_layer_params(lp, NUM_HEADS, HIDDEN)
        cmats.append(c)
        wcombs.append(w)
        bouts.append(lp["bout"][0])
        g1s.append(lp["g1"][0]); b1s.append(lp["b1"][0])
        g2s.append(lp["g2"][0]); b2s.append(lp["b2"][0])
    cmat = jnp.concatenate(cmats, axis=0)        # [10*L*H, 10]
    wcomb = jnp.concatenate(wcombs, axis=0)      # [L*4H, hidden]
    bout = jnp.stack(bouts)
    g1 = jnp.stack(g1s); b1 = jnp.stack(b1s)
    g2 = jnp.stack(g2s); b2 = jnp.stack(b2s)     # each [L, hidden]

    vmem = pl.BlockSpec(memory_space=pltpu.MemorySpace.VMEM)
    in_specs = [vmem] * 19

    n2 = n * n
    mm_flops = 2 * (
        n * 100 + n2 * 10                                             # dist2
        + NUM_LAYERS * NUM_HEADS * (n * 100 + n2 * 10                 # scores
                                    + n2 * 4 + n * 4 * HIDDEN)        # S_h + wcomb
        + n * 4 * HIDDEN                                              # embedding
        + num_batches * n * HIDDEN
        + num_batches * (HIDDEN * HIDDEN + HIDDEN * OUT_DIM))
    vpu_flops = (n2 * (4 + NUM_LAYERS * (2 * NUM_HEADS + 8))
                 + NUM_LAYERS * n * HIDDEN * 14 + n * 10)
    flops = int(mm_flops + vpu_flops)
    transcendentals = int(n2 * NUM_LAYERS * (NUM_HEADS + 1)
                          + NUM_LAYERS * n * HIDDEN + num_batches * HIDDEN)
    bytes_accessed = int(4 * (
        n * (4 + 4 + 10 + 10 + 2)
        + cmat.size + dmat.size + wcomb.size + embw.size
        + 5 * NUM_LAYERS * HIDDEN
        + HIDDEN * (HIDDEN + 1) + HIDDEN * OUT_DIM + OUT_DIM
        + num_batches * OUT_DIM))

    fn = pl.pallas_call(
        functools.partial(
            se3_fused_kernel,
            num_layers=NUM_LAYERS, num_heads=NUM_HEADS,
            cutoff=CUTOFF, num_batches=num_batches,
        ),
        out_shape=jax.ShapeDtypeStruct((num_batches, OUT_DIM), jnp.float32),
        in_specs=in_specs,
        out_specs=vmem,
        compiler_params=pltpu.CompilerParams(vmem_limit_bytes=48 * 1024 * 1024),
        cost_estimate=pl.CostEstimate(
            flops=flops, transcendentals=transcendentals,
            bytes_accessed=bytes_accessed),
    )
    return fn(
        paug, posz, f, ft, bcol, brow,
        embw, cmat, dmat, wcomb, bout, g1, b1, g2, b2,
        params["out_w1"], params["out_b1"], params["out_w2"], params["out_b2"],
    )


if __name__ == "__main__":
    key = jax.random.PRNGKey(0)
    pkey, xkey = jax.random.split(key)

    N = 8            # atoms
    B = 2            # molecules in the batch
    positions = jax.random.normal(xkey, (N, 3), jnp.float32)
    batch_indices = jnp.array([0, 0, 0, 0, 1, 1, 1, 1], dtype=jnp.int32)

    params = init_params(pkey)
    out = se3_transformer_forward(positions, batch_indices, params, num_batches=B)
    out = jax.block_until_ready(out)

    assert out.shape == (B, OUT_DIM) and out.dtype == jnp.float32
    assert bool(jnp.all(jnp.isfinite(out)))
    print("KERNEL_OK")
</pallas_src>

<mosaic_0001>
module attributes {stable_mosaic.version = 11 : i64} {
  func.func @se3_fused_kernel(%arg0: memref<8x4xf32, #tpu.memory_space<vmem>>, %arg1: memref<8x4xf32, #tpu.memory_space<vmem>>, %arg2: memref<8x10xf32, #tpu.memory_space<vmem>>, %arg3: memref<10x8xf32, #tpu.memory_space<vmem>>, %arg4: memref<8x1xi32, #tpu.memory_space<vmem>>, %arg5: memref<1x8xi32, #tpu.memory_space<vmem>>, %arg6: memref<4x32xf32, #tpu.memory_space<vmem>>, %arg7: memref<80x10xf32, #tpu.memory_space<vmem>>, %arg8: memref<10x10xf32, #tpu.memory_space<vmem>>, %arg9: memref<32x32xf32, #tpu.memory_space<vmem>>, %arg10: memref<2x32xf32, #tpu.memory_space<vmem>>, %arg11: memref<2x32xf32, #tpu.memory_space<vmem>>, %arg12: memref<2x32xf32, #tpu.memory_space<vmem>>, %arg13: memref<2x32xf32, #tpu.memory_space<vmem>>, %arg14: memref<2x32xf32, #tpu.memory_space<vmem>>, %arg15: memref<32x32xf32, #tpu.memory_space<vmem>>, %arg16: memref<1x32xf32, #tpu.memory_space<vmem>>, %arg17: memref<32x128xf32, #tpu.memory_space<vmem>>, %arg18: memref<1x128xf32, #tpu.memory_space<vmem>>, %arg19: memref<2x128xf32, #tpu.memory_space<vmem>>) attributes {dimension_semantics = [], scalar_prefetch = 0 : i64, scratch_operands = 0 : i64, tpu.core_type = #tpu.core_type<tc>} {
    %c0 = arith.constant 0 : index
    %c0_0 = arith.constant 0 : index
    %0 = vector.load %arg0[%c0, %c0_0] : memref<8x4xf32, #tpu.memory_space<vmem>>, vector<8x4xf32>
    %c0_1 = arith.constant 0 : index
    %c0_2 = arith.constant 0 : index
    %1 = vector.load %arg1[%c0_1, %c0_2] : memref<8x4xf32, #tpu.memory_space<vmem>>, vector<8x4xf32>
    %c0_3 = arith.constant 0 : index
    %c0_4 = arith.constant 0 : index
    %2 = vector.load %arg2[%c0_3, %c0_4] : memref<8x10xf32, #tpu.memory_space<vmem>>, vector<8x10xf32>
    %c0_5 = arith.constant 0 : index
    %c0_6 = arith.constant 0 : index
    %3 = vector.load %arg3[%c0_5, %c0_6] : memref<10x8xf32, #tpu.memory_space<vmem>>, vector<10x8xf32>
    %c0_7 = arith.constant 0 : index
    %c0_8 = arith.constant 0 : index
    %4 = vector.load %arg8[%c0_7, %c0_8] : memref<10x10xf32, #tpu.memory_space<vmem>>, vector<10x10xf32>
    %cst = arith.constant dense<0.000000e+00> : vector<8x10xf32>
    %5 = tpu.matmul %2, %4, %cst {dimension_numbers = #tpu.dot_dimension_numbers<[1], [0], [0], [1], [0, 0, 1, 1], [], []>} : vector<8x10xf32>, vector<10x10xf32>, vector<8x10xf32> -> vector<8x10xf32>
    %cst_9 = arith.constant dense<0.000000e+00> : vector<8x8xf32>
    %6 = tpu.matmul %5, %3, %cst_9 {dimension_numbers = #tpu.dot_dimension_numbers<[1], [0], [0], [1], [0, 0, 1, 1], [], []>} : vector<8x10xf32>, vector<10x8xf32>, vector<8x8xf32> -> vector<8x8xf32>
    %c0_10 = arith.constant 0 : index
    %c0_11 = arith.constant 0 : index
    %7 = vector.load %arg4[%c0_10, %c0_11] : memref<8x1xi32, #tpu.memory_space<vmem>>, vector<8x1xi32>
    %c0_12 = arith.constant 0 : index
    %c0_13 = arith.constant 0 : index
    %8 = vector.load %arg5[%c0_12, %c0_13] : memref<1x8xi32, #tpu.memory_space<vmem>>, vector<1x8xi32>
    %9 = vector.broadcast %7 : vector<8x1xi32> to vector<8x8xi32>
    %10 = vector.broadcast %8 : vector<1x8xi32> to vector<8x8xi32>
    %11 = arith.cmpi eq, %9, %10 : vector<8x8xi32>
    %12 = tpu.iota {dimensions = array<i32: 0>} : vector<8x8xi32>
    %13 = tpu.iota {dimensions = array<i32: 1>} : vector<8x8xi32>
    %14 = arith.cmpi ne, %12, %13 : vector<8x8xi32>
    %15 = arith.andi %11, %14 : vector<8x8xi1>
    %cst_14 = arith.constant 3.240000e+00 : f32
    %16 = vector.broadcast %cst_14 : f32 to vector<8x8xf32>
    %17 = arith.cmpf ole, %6, %16 : vector<8x8xf32>
    %18 = arith.andi %15, %17 : vector<8x8xi1>
    %cst_15 = arith.constant 1.000000e+00 : f32
    %cst_16 = arith.constant 0.000000e+00 : f32
    %19 = vector.broadcast %cst_15 : f32 to vector<8x8xf32>
    %20 = vector.broadcast %cst_16 : f32 to vector<8x8xf32>
    %21 = arith.select %18, %19, %20 : vector<8x8xi1>, vector<8x8xf32>
    %cst_17 = arith.constant dense<0.000000e+00> : vector<8xf32>
    %22 = vector.multi_reduction <add>, %21, %cst_17 [1] : vector<8x8xf32> to vector<8xf32>
    %23 = vector.shape_cast %22 : vector<8xf32> to vector<8x1xf32>
    %cst_18 = arith.constant 1.000000e+00 : f32
    %24 = vector.broadcast %cst_18 : f32 to vector<8x1xf32>
    %25 = arith.maximumf %23, %24 : vector<8x1xf32>
    %cst_19 = arith.constant 1.000000e+00 : f32
    %26 = vector.broadcast %cst_19 : f32 to vector<8x1xf32>
    %27 = arith.divf %26, %25 : vector<8x1xf32>
    %c0_20 = arith.constant 0 : index
    %c0_21 = arith.constant 0 : index
    %28 = vector.load %arg6[%c0_20, %c0_21] : memref<4x32xf32, #tpu.memory_space<vmem>>, vector<4x32xf32>
    %cst_22 = arith.constant dense<0.000000e+00> : vector<8x32xf32>
    %29 = tpu.matmul %0, %28, %cst_22 {dimension_numbers = #tpu.dot_dimension_numbers<[1], [0], [0], [1], [0, 0, 1, 1], [], []>} : vector<8x4xf32>, vector<4x32xf32>, vector<8x32xf32> -> vector<8x32xf32>
    %c0_23 = arith.constant 0 : index
    %c0_24 = arith.constant 0 : index
    %30 = vector.load %arg7[%c0_23, %c0_24] : memref<80x10xf32, #tpu.memory_space<vmem>>, vector<10x10xf32>
    %cst_25 = arith.constant dense<0.000000e+00> : vector<8x10xf32>
    %31 = tpu.matmul %2, %30, %cst_25 {dimension_numbers = #tpu.dot_dimension_numbers<[1], [0], [0], [1], [0, 0, 1, 1], [], []>} : vector<8x10xf32>, vector<10x10xf32>, vector<8x10xf32> -> vector<8x10xf32>
    %cst_26 = arith.constant dense<0.000000e+00> : vector<8x8xf32>
    %32 = tpu.matmul %31, %3, %cst_26 {dimension_numbers = #tpu.dot_dimension_numbers<[1], [0], [0], [1], [0, 0, 1, 1], [], []>} : vector<8x10xf32>, vector<10x8xf32>, vector<8x8xf32> -> vector<8x8xf32>
    %c10 = arith.constant 10 : index
    %c0_27 = arith.constant 0 : index
    %33 = vector.load %arg7[%c10, %c0_27] : memref<80x10xf32, #tpu.memory_space<vmem>>, vector<10x10xf32>
    %cst_28 = arith.constant dense<0.000000e+00> : vector<8x10xf32>
    %34 = tpu.matmul %2, %33, %cst_28 {dimension_numbers = #tpu.dot_dimension_numbers<[1], [0], [0], [1], [0, 0, 1, 1], [], []>} : vector<8x10xf32>, vector<10x10xf32>, vector<8x10xf32> -> vector<8x10xf32>
    %cst_29 = arith.constant dense<0.000000e+00> : vector<8x8xf32>
    %35 = tpu.matmul %34, %3, %cst_29 {dimension_numbers = #tpu.dot_dimension_numbers<[1], [0], [0], [1], [0, 0, 1, 1], [], []>} : vector<8x10xf32>, vector<10x8xf32>, vector<8x8xf32> -> vector<8x8xf32>
    %c20 = arith.constant 20 : index
    %c0_30 = arith.constant 0 : index
    %36 = vector.load %arg7[%c20, %c0_30] : memref<80x10xf32, #tpu.memory_space<vmem>>, vector<10x10xf32>
    %cst_31 = arith.constant dense<0.000000e+00> : vector<8x10xf32>
    %37 = tpu.matmul %2, %36, %cst_31 {dimension_numbers = #tpu.dot_dimension_numbers<[1], [0], [0], [1], [0, 0, 1, 1], [], []>} : vector<8x10xf32>, vector<10x10xf32>, vector<8x10xf32> -> vector<8x10xf32>
    %cst_32 = arith.constant dense<0.000000e+00> : vector<8x8xf32>
    %38 = tpu.matmul %37, %3, %cst_32 {dimension_numbers = #tpu.dot_dimension_numbers<[1], [0], [0], [1], [0, 0, 1, 1], [], []>} : vector<8x10xf32>, vector<10x8xf32>, vector<8x8xf32> -> vector<8x8xf32>
    %c30 = arith.constant 30 : index
    %c0_33 = arith.constant 0 : index
    %39 = vector.load %arg7[%c30, %c0_33] : memref<80x10xf32, #tpu.memory_space<vmem>>, vector<10x10xf32>
    %cst_34 = arith.constant dense<0.000000e+00> : vector<8x10xf32>
    %40 = tpu.matmul %2, %39, %cst_34 {dimension_numbers = #tpu.dot_dimension_numbers<[1], [0], [0], [1], [0, 0, 1, 1], [], []>} : vector<8x10xf32>, vector<10x10xf32>, vector<8x10xf32> -> vector<8x10xf32>
    %cst_35 = arith.constant dense<0.000000e+00> : vector<8x8xf32>
    %41 = tpu.matmul %40, %3, %cst_35 {dimension_numbers = #tpu.dot_dimension_numbers<[1], [0], [0], [1], [0, 0, 1, 1], [], []>} : vector<8x10xf32>, vector<10x8xf32>, vector<8x8xf32> -> vector<8x8xf32>
    %42 = arith.maximumf %32, %35 : vector<8x8xf32>
    %43 = arith.maximumf %42, %38 : vector<8x8xf32>
    %44 = arith.maximumf %43, %41 : vector<8x8xf32>
    %45 = arith.subf %32, %44 : vector<8x8xf32>
    %46 = math.exp %45 : vector<8x8xf32>
    %47 = arith.subf %35, %44 : vector<8x8xf32>
    %48 = math.exp %47 : vector<8x8xf32>
    %49 = arith.subf %38, %44 : vector<8x8xf32>
    %50 = math.exp %49 : vector<8x8xf32>
    %51 = arith.subf %41, %44 : vector<8x8xf32>
    %52 = math.exp %51 : vector<8x8xf32>
    %53 = arith.addf %46, %48 : vector<8x8xf32>
    %54 = arith.addf %53, %50 : vector<8x8xf32>
    %55 = arith.addf %54, %52 : vector<8x8xf32>
    %56 = tpu.reciprocal %55 {approx = true} : vector<8x8xf32> -> vector<8x8xf32>
    %57 = arith.mulf %21, %56 : vector<8x8xf32>
    %cst_36 = arith.constant 0.000000e+00 : f32
    %58 = vector.broadcast %cst_36 : f32 to vector<8x32xf32>
    %59 = arith.mulf %46, %57 : vector<8x8xf32>
    %cst_37 = arith.constant dense<0.000000e+00> : vector<8x4xf32>
    %60 = tpu.matmul %59, %0, %cst_37 {dimension_numbers = #tpu.dot_dimension_numbers<[1], [0], [0], [1], [0, 0, 1, 1], [], []>} : vector<8x8xf32>, vector<8x4xf32>, vector<8x4xf32> -> vector<8x4xf32>
    %61 = vector.extract_strided_slice %60 {offsets = [0, 3], sizes = [8, 1], strides = [1, 1]} : vector<8x4xf32> to vector<8x1xf32>
    %62 = vector.broadcast %61 : vector<8x1xf32> to vector<8x4xf32>
    %63 = arith.mulf %1, %62 : vector<8x4xf32>
    %64 = arith.subf %60, %63 : vector<8x4xf32>
    %c0_38 = arith.constant 0 : index
    %c0_39 = arith.constant 0 : index
    %65 = vector.load %arg9[%c0_38, %c0_39] : memref<32x32xf32, #tpu.memory_space<vmem>>, vector<4x32xf32>
    %cst_40 = arith.constant dense<0.000000e+00> : vector<8x32xf32>
    %66 = tpu.matmul %64, %65, %cst_40 {dimension_numbers = #tpu.dot_dimension_numbers<[1], [0], [0], [1], [0, 0, 1, 1], [], []>} : vector<8x4xf32>, vector<4x32xf32>, vector<8x32xf32> -> vector<8x32xf32>
    %67 = arith.addf %58, %66 : vector<8x32xf32>
    %68 = arith.mulf %48, %57 : vector<8x8xf32>
    %cst_41 = arith.constant dense<0.000000e+00> : vector<8x4xf32>
    %69 = tpu.matmul %68, %0, %cst_41 {dimension_numbers = #tpu.dot_dimension_numbers<[1], [0], [0], [1], [0, 0, 1, 1], [], []>} : vector<8x8xf32>, vector<8x4xf32>, vector<8x4xf32> -> vector<8x4xf32>
    %70 = vector.extract_strided_slice %69 {offsets = [0, 3], sizes = [8, 1], strides = [1, 1]} : vector<8x4xf32> to vector<8x1xf32>
    %71 = vector.broadcast %70 : vector<8x1xf32> to vector<8x4xf32>
    %72 = arith.mulf %1, %71 : vector<8x4xf32>
    %73 = arith.subf %69, %72 : vector<8x4xf32>
    %c4 = arith.constant 4 : index
    %c0_42 = arith.constant 0 : index
    %74 = vector.load %arg9[%c4, %c0_42] : memref<32x32xf32, #tpu.memory_space<vmem>>, vector<4x32xf32>
    %cst_43 = arith.constant dense<0.000000e+00> : vector<8x32xf32>
    %75 = tpu.matmul %73, %74, %cst_43 {dimension_numbers = #tpu.dot_dimension_numbers<[1], [0], [0], [1], [0, 0, 1, 1], [], []>} : vector<8x4xf32>, vector<4x32xf32>, vector<8x32xf32> -> vector<8x32xf32>
    %76 = arith.addf %67, %75 : vector<8x32xf32>
    %77 = arith.mulf %50, %57 : vector<8x8xf32>
    %cst_44 = arith.constant dense<0.000000e+00> : vector<8x4xf32>
    %78 = tpu.matmul %77, %0, %cst_44 {dimension_numbers = #tpu.dot_dimension_numbers<[1], [0], [0], [1], [0, 0, 1, 1], [], []>} : vector<8x8xf32>, vector<8x4xf32>, vector<8x4xf32> -> vector<8x4xf32>
    %79 = vector.extract_strided_slice %78 {offsets = [0, 3], sizes = [8, 1], strides = [1, 1]} : vector<8x4xf32> to vector<8x1xf32>
    %80 = vector.broadcast %79 : vector<8x1xf32> to vector<8x4xf32>
    %81 = arith.mulf %1, %80 : vector<8x4xf32>
    %82 = arith.subf %78, %81 : vector<8x4xf32>
    %c8 = arith.constant 8 : index
    %c0_45 = arith.constant 0 : index
    %83 = vector.load %arg9[%c8, %c0_45] : memref<32x32xf32, #tpu.memory_space<vmem>>, vector<4x32xf32>
    %cst_46 = arith.constant dense<0.000000e+00> : vector<8x32xf32>
    %84 = tpu.matmul %82, %83, %cst_46 {dimension_numbers = #tpu.dot_dimension_numbers<[1], [0], [0], [1], [0, 0, 1, 1], [], []>} : vector<8x4xf32>, vector<4x32xf32>, vector<8x32xf32> -> vector<8x32xf32>
    %85 = arith.addf %76, %84 : vector<8x32xf32>
    %86 = arith.mulf %52, %57 : vector<8x8xf32>
    %cst_47 = arith.constant dense<0.000000e+00> : vector<8x4xf32>
    %87 = tpu.matmul %86, %0, %cst_47 {dimension_numbers = #tpu.dot_dimension_numbers<[1], [0], [0], [1], [0, 0, 1, 1], [], []>} : vector<8x8xf32>, vector<8x4xf32>, vector<8x4xf32> -> vector<8x4xf32>
    %88 = vector.extract_strided_slice %87 {offsets = [0, 3], sizes = [8, 1], strides = [1, 1]} : vector<8x4xf32> to vector<8x1xf32>
    %89 = vector.broadcast %88 : vector<8x1xf32> to vector<8x4xf32>
    %90 = arith.mulf %1, %89 : vector<8x4xf32>
    %91 = arith.subf %87, %90 : vector<8x4xf32>
    %c12 = arith.constant 12 : index
    %c0_48 = arith.constant 0 : index
    %92 = vector.load %arg9[%c12, %c0_48] : memref<32x32xf32, #tpu.memory_space<vmem>>, vector<4x32xf32>
    %cst_49 = arith.constant dense<0.000000e+00> : vector<8x32xf32>
    %93 = tpu.matmul %91, %92, %cst_49 {dimension_numbers = #tpu.dot_dimension_numbers<[1], [0], [0], [1], [0, 0, 1, 1], [], []>} : vector<8x4xf32>, vector<4x32xf32>, vector<8x32xf32> -> vector<8x32xf32>
    %94 = arith.addf %85, %93 : vector<8x32xf32>
    %95 = vector.broadcast %27 : vector<8x1xf32> to vector<8x32xf32>
    %96 = arith.mulf %94, %95 : vector<8x32xf32>
    %c0_50 = arith.constant 0 : index
    %c0_51 = arith.constant 0 : index
    %97 = vector.load %arg10[%c0_50, %c0_51] : memref<2x32xf32, #tpu.memory_space<vmem>>, vector<1x32xf32>
    %98 = vector.broadcast %97 : vector<1x32xf32> to vector<8x32xf32>
    %99 = arith.addf %96, %98 : vector<8x32xf32>
    %c0_52 = arith.constant 0 : index
    %c0_53 = arith.constant 0 : index
    %100 = vector.load %arg11[%c0_52, %c0_53] : memref<2x32xf32, #tpu.memory_space<vmem>>, vector<1x32xf32>
    %c0_54 = arith.constant 0 : index
    %c0_55 = arith.constant 0 : index
    %101 = vector.load %arg12[%c0_54, %c0_55] : memref<2x32xf32, #tpu.memory_space<vmem>>, vector<1x32xf32>
    %cst_56 = arith.constant dense<0.000000e+00> : vector<8xf32>
    %102 = vector.multi_reduction <add>, %99, %cst_56 [1] : vector<8x32xf32> to vector<8xf32>
    %103 = vector.shape_cast %102 : vector<8xf32> to vector<8x1xf32>
    %cst_57 = arith.constant 3.200000e+01 : f32
    %104 = vector.broadcast %cst_57 : f32 to vector<8x1xf32>
    %105 = arith.divf %103, %104 : vector<8x1xf32>
    %106 = vector.broadcast %105 : vector<8x1xf32> to vector<8x32xf32>
    %107 = arith.subf %99, %106 : vector<8x32xf32>
    %108 = arith.mulf %107, %107 : vector<8x32xf32>
    %cst_58 = arith.constant dense<0.000000e+00> : vector<8xf32>
    %109 = vector.multi_reduction <add>, %108, %cst_58 [1] : vector<8x32xf32> to vector<8xf32>
    %110 = vector.shape_cast %109 : vector<8xf32> to vector<8x1xf32>
    %cst_59 = arith.constant 3.200000e+01 : f32
    %111 = vector.broadcast %cst_59 : f32 to vector<8x1xf32>
    %112 = arith.divf %110, %111 : vector<8x1xf32>
    %113 = vector.broadcast %105 : vector<8x1xf32> to vector<8x32xf32>
    %114 = arith.subf %99, %113 : vector<8x32xf32>
    %cst_60 = arith.constant 9.99999974E-6 : f32
    %115 = vector.broadcast %cst_60 : f32 to vector<8x1xf32>
    %116 = arith.addf %112, %115 : vector<8x1xf32>
    %117 = math.rsqrt %116 : vector<8x1xf32>
    %118 = vector.broadcast %117 : vector<8x1xf32> to vector<8x32xf32>
    %119 = arith.mulf %114, %118 : vector<8x32xf32>
    %120 = vector.broadcast %100 : vector<1x32xf32> to vector<8x32xf32>
    %121 = arith.mulf %119, %120 : vector<8x32xf32>
    %122 = vector.broadcast %101 : vector<1x32xf32> to vector<8x32xf32>
    %123 = arith.addf %121, %122 : vector<8x32xf32>
    %124 = arith.negf %123 : vector<8x32xf32>
    %125 = math.exp %124 : vector<8x32xf32>
    %cst_61 = arith.constant 1.000000e+00 : f32
    %126 = vector.broadcast %cst_61 : f32 to vector<8x32xf32>
    %127 = arith.addf %126, %125 : vector<8x32xf32>
    %128 = arith.divf %126, %127 : vector<8x32xf32>
    %129 = arith.mulf %123, %128 : vector<8x32xf32>
    %130 = arith.addf %29, %129 : vector<8x32xf32>
    %c0_62 = arith.constant 0 : index
    %c0_63 = arith.constant 0 : index
    %131 = vector.load %arg13[%c0_62, %c0_63] : memref<2x32xf32, #tpu.memory_space<vmem>>, vector<1x32xf32>
    %c0_64 = arith.constant 0 : index
    %c0_65 = arith.constant 0 : index
    %132 = vector.load %arg14[%c0_64, %c0_65] : memref<2x32xf32, #tpu.memory_space<vmem>>, vector<1x32xf32>
    %cst_66 = arith.constant dense<0.000000e+00> : vector<8xf32>
    %133 = vector.multi_reduction <add>, %130, %cst_66 [1] : vector<8x32xf32> to vector<8xf32>
    %134 = vector.shape_cast %133 : vector<8xf32> to vector<8x1xf32>
    %cst_67 = arith.constant 3.200000e+01 : f32
    %135 = vector.broadcast %cst_67 : f32 to vector<8x1xf32>
    %136 = arith.divf %134, %135 : vector<8x1xf32>
    %137 = vector.broadcast %136 : vector<8x1xf32> to vector<8x32xf32>
    %138 = arith.subf %130, %137 : vector<8x32xf32>
    %139 = arith.mulf %138, %138 : vector<8x32xf32>
    %cst_68 = arith.constant dense<0.000000e+00> : vector<8xf32>
    %140 = vector.multi_reduction <add>, %139, %cst_68 [1] : vector<8x32xf32> to vector<8xf32>
    %141 = vector.shape_cast %140 : vector<8xf32> to vector<8x1xf32>
    %cst_69 = arith.constant 3.200000e+01 : f32
    %142 = vector.broadcast %cst_69 : f32 to vector<8x1xf32>
    %143 = arith.divf %141, %142 : vector<8x1xf32>
    %144 = vector.broadcast %136 : vector<8x1xf32> to vector<8x32xf32>
    %145 = arith.subf %130, %144 : vector<8x32xf32>
    %cst_70 = arith.constant 9.99999974E-6 : f32
    %146 = vector.broadcast %cst_70 : f32 to vector<8x1xf32>
    %147 = arith.addf %143, %146 : vector<8x1xf32>
    %148 = math.rsqrt %147 : vector<8x1xf32>
    %149 = vector.broadcast %148 : vector<8x1xf32> to vector<8x32xf32>
    %150 = arith.mulf %145, %149 : vector<8x32xf32>
    %151 = vector.broadcast %131 : vector<1x32xf32> to vector<8x32xf32>
    %152 = arith.mulf %150, %151 : vector<8x32xf32>
    %153 = vector.broadcast %132 : vector<1x32xf32> to vector<8x32xf32>
    %154 = arith.addf %152, %153 : vector<8x32xf32>
    %c40 = arith.constant 40 : index
    %c0_71 = arith.constant 0 : index
    %155 = vector.load %arg7[%c40, %c0_71] : memref<80x10xf32, #tpu.memory_space<vmem>>, vector<10x10xf32>
    %cst_72 = arith.constant dense<0.000000e+00> : vector<8x10xf32>
    %156 = tpu.matmul %2, %155, %cst_72 {dimension_numbers = #tpu.dot_dimension_numbers<[1], [0], [0], [1], [0, 0, 1, 1], [], []>} : vector<8x10xf32>, vector<10x10xf32>, vector<8x10xf32> -> vector<8x10xf32>
    %cst_73 = arith.constant dense<0.000000e+00> : vector<8x8xf32>
    %157 = tpu.matmul %156, %3, %cst_73 {dimension_numbers = #tpu.dot_dimension_numbers<[1], [0], [0], [1], [0, 0, 1, 1], [], []>} : vector<8x10xf32>, vector<10x8xf32>, vector<8x8xf32> -> vector<8x8xf32>
    %c50 = arith.constant 50 : index
    %c0_74 = arith.constant 0 : index
    %158 = vector.load %arg7[%c50, %c0_74] : memref<80x10xf32, #tpu.memory_space<vmem>>, vector<10x10xf32>
    %cst_75 = arith.constant dense<0.000000e+00> : vector<8x10xf32>
    %159 = tpu.matmul %2, %158, %cst_75 {dimension_numbers = #tpu.dot_dimension_numbers<[1], [0], [0], [1], [0, 0, 1, 1], [], []>} : vector<8x10xf32>, vector<10x10xf32>, vector<8x10xf32> -> vector<8x10xf32>
    %cst_76 = arith.constant dense<0.000000e+00> : vector<8x8xf32>
    %160 = tpu.matmul %159, %3, %cst_76 {dimension_numbers = #tpu.dot_dimension_numbers<[1], [0], [0], [1], [0, 0, 1, 1], [], []>} : vector<8x10xf32>, vector<10x8xf32>, vector<8x8xf32> -> vector<8x8xf32>
    %c60 = arith.constant 60 : index
    %c0_77 = arith.constant 0 : index
    %161 = vector.load %arg7[%c60, %c0_77] : memref<80x10xf32, #tpu.memory_space<vmem>>, vector<10x10xf32>
    %cst_78 = arith.constant dense<0.000000e+00> : vector<8x10xf32>
    %162 = tpu.matmul %2, %161, %cst_78 {dimension_numbers = #tpu.dot_dimension_numbers<[1], [0], [0], [1], [0, 0, 1, 1], [], []>} : vector<8x10xf32>, vector<10x10xf32>, vector<8x10xf32> -> vector<8x10xf32>
    %cst_79 = arith.constant dense<0.000000e+00> : vector<8x8xf32>
    %163 = tpu.matmul %162, %3, %cst_79 {dimension_numbers = #tpu.dot_dimension_numbers<[1], [0], [0], [1], [0, 0, 1, 1], [], []>} : vector<8x10xf32>, vector<10x8xf32>, vector<8x8xf32> -> vector<8x8xf32>
    %c70 = arith.constant 70 : index
    %c0_80 = arith.constant 0 : index
    %164 = vector.load %arg7[%c70, %c0_80] : memref<80x10xf32, #tpu.memory_space<vmem>>, vector<10x10xf32>
    %cst_81 = arith.constant dense<0.000000e+00> : vector<8x10xf32>
    %165 = tpu.matmul %2, %164, %cst_81 {dimension_numbers = #tpu.dot_dimension_numbers<[1], [0], [0], [1], [0, 0, 1, 1], [], []>} : vector<8x10xf32>, vector<10x10xf32>, vector<8x10xf32> -> vector<8x10xf32>
    %cst_82 = arith.constant dense<0.000000e+00> : vector<8x8xf32>
    %166 = tpu.matmul %165, %3, %cst_82 {dimension_numbers = #tpu.dot_dimension_numbers<[1], [0], [0], [1], [0, 0, 1, 1], [], []>} : vector<8x10xf32>, vector<10x8xf32>, vector<8x8xf32> -> vector<8x8xf32>
    %167 = arith.maximumf %157, %160 : vector<8x8xf32>
    %168 = arith.maximumf %167, %163 : vector<8x8xf32>
    %169 = arith.maximumf %168, %166 : vector<8x8xf32>
    %170 = arith.subf %157, %169 : vector<8x8xf32>
    %171 = math.exp %170 : vector<8x8xf32>
    %172 = arith.subf %160, %169 : vector<8x8xf32>
    %173 = math.exp %172 : vector<8x8xf32>
    %174 = arith.subf %163, %169 : vector<8x8xf32>
    %175 = math.exp %174 : vector<8x8xf32>
    %176 = arith.subf %166, %169 : vector<8x8xf32>
    %177 = math.exp %176 : vector<8x8xf32>
    %178 = arith.addf %171, %173 : vector<8x8xf32>
    %179 = arith.addf %178, %175 : vector<8x8xf32>
    %180 = arith.addf %179, %177 : vector<8x8xf32>
    %181 = tpu.reciprocal %180 {approx = true} : vector<8x8xf32> -> vector<8x8xf32>
    %182 = arith.mulf %21, %181 : vector<8x8xf32>
    %cst_83 = arith.constant 0.000000e+00 : f32
    %183 = vector.broadcast %cst_83 : f32 to vector<8x32xf32>
    %184 = arith.mulf %171, %182 : vector<8x8xf32>
    %cst_84 = arith.constant dense<0.000000e+00> : vector<8x4xf32>
    %185 = tpu.matmul %184, %0, %cst_84 {dimension_numbers = #tpu.dot_dimension_numbers<[1], [0], [0], [1], [0, 0, 1, 1], [], []>} : vector<8x8xf32>, vector<8x4xf32>, vector<8x4xf32> -> vector<8x4xf32>
    %186 = vector.extract_strided_slice %185 {offsets = [0, 3], sizes = [8, 1], strides = [1, 1]} : vector<8x4xf32> to vector<8x1xf32>
    %187 = vector.broadcast %186 : vector<8x1xf32> to vector<8x4xf32>
    %188 = arith.mulf %1, %187 : vector<8x4xf32>
    %189 = arith.subf %185, %188 : vector<8x4xf32>
    %c16 = arith.constant 16 : index
    %c0_85 = arith.constant 0 : index
    %190 = vector.load %arg9[%c16, %c0_85] : memref<32x32xf32, #tpu.memory_space<vmem>>, vector<4x32xf32>
    %cst_86 = arith.constant dense<0.000000e+00> : vector<8x32xf32>
    %191 = tpu.matmul %189, %190, %cst_86 {dimension_numbers = #tpu.dot_dimension_numbers<[1], [0], [0], [1], [0, 0, 1, 1], [], []>} : vector<8x4xf32>, vector<4x32xf32>, vector<8x32xf32> -> vector<8x32xf32>
    %192 = arith.addf %183, %191 : vector<8x32xf32>
    %193 = arith.mulf %173, %182 : vector<8x8xf32>
    %cst_87 = arith.constant dense<0.000000e+00> : vector<8x4xf32>
    %194 = tpu.matmul %193, %0, %cst_87 {dimension_numbers = #tpu.dot_dimension_numbers<[1], [0], [0], [1], [0, 0, 1, 1], [], []>} : vector<8x8xf32>, vector<8x4xf32>, vector<8x4xf32> -> vector<8x4xf32>
    %195 = vector.extract_strided_slice %194 {offsets = [0, 3], sizes = [8, 1], strides = [1, 1]} : vector<8x4xf32> to vector<8x1xf32>
    %196 = vector.broadcast %195 : vector<8x1xf32> to vector<8x4xf32>
    %197 = arith.mulf %1, %196 : vector<8x4xf32>
    %198 = arith.subf %194, %197 : vector<8x4xf32>
    %c20_88 = arith.constant 20 : index
    %c0_89 = arith.constant 0 : index
    %199 = vector.load %arg9[%c20_88, %c0_89] : memref<32x32xf32, #tpu.memory_space<vmem>>, vector<4x32xf32>
    %cst_90 = arith.constant dense<0.000000e+00> : vector<8x32xf32>
    %200 = tpu.matmul %198, %199, %cst_90 {dimension_numbers = #tpu.dot_dimension_numbers<[1], [0], [0], [1], [0, 0, 1, 1], [], []>} : vector<8x4xf32>, vector<4x32xf32>, vector<8x32xf32> -> vector<8x32xf32>
    %201 = arith.addf %192, %200 : vector<8x32xf32>
    %202 = arith.mulf %175, %182 : vector<8x8xf32>
    %cst_91 = arith.constant dense<0.000000e+00> : vector<8x4xf32>
    %203 = tpu.matmul %202, %0, %cst_91 {dimension_numbers = #tpu.dot_dimension_numbers<[1], [0], [0], [1], [0, 0, 1, 1], [], []>} : vector<8x8xf32>, vector<8x4xf32>, vector<8x4xf32> -> vector<8x4xf32>
    %204 = vector.extract_strided_slice %203 {offsets = [0, 3], sizes = [8, 1], strides = [1, 1]} : vector<8x4xf32> to vector<8x1xf32>
    %205 = vector.broadcast %204 : vector<8x1xf32> to vector<8x4xf32>
    %206 = arith.mulf %1, %205 : vector<8x4xf32>
    %207 = arith.subf %203, %206 : vector<8x4xf32>
    %c24 = arith.constant 24 : index
    %c0_92 = arith.constant 0 : index
    %208 = vector.load %arg9[%c24, %c0_92] : memref<32x32xf32, #tpu.memory_space<vmem>>, vector<4x32xf32>
    %cst_93 = arith.constant dense<0.000000e+00> : vector<8x32xf32>
    %209 = tpu.matmul %207, %208, %cst_93 {dimension_numbers = #tpu.dot_dimension_numbers<[1], [0], [0], [1], [0, 0, 1, 1], [], []>} : vector<8x4xf32>, vector<4x32xf32>, vector<8x32xf32> -> vector<8x32xf32>
    %210 = arith.addf %201, %209 : vector<8x32xf32>
    %211 = arith.mulf %177, %182 : vector<8x8xf32>
    %cst_94 = arith.constant dense<0.000000e+00> : vector<8x4xf32>
    %212 = tpu.matmul %211, %0, %cst_94 {dimension_numbers = #tpu.dot_dimension_numbers<[1], [0], [0], [1], [0, 0, 1, 1], [], []>} : vector<8x8xf32>, vector<8x4xf32>, vector<8x4xf32> -> vector<8x4xf32>
    %213 = vector.extract_strided_slice %212 {offsets = [0, 3], sizes = [8, 1], strides = [1, 1]} : vector<8x4xf32> to vector<8x1xf32>
    %214 = vector.broadcast %213 : vector<8x1xf32> to vector<8x4xf32>
    %215 = arith.mulf %1, %214 : vector<8x4xf32>
    %216 = arith.subf %212, %215 : vector<8x4xf32>
    %c28 = arith.constant 28 : index
    %c0_95 = arith.constant 0 : index
    %217 = vector.load %arg9[%c28, %c0_95] : memref<32x32xf32, #tpu.memory_space<vmem>>, vector<4x32xf32>
    %cst_96 = arith.constant dense<0.000000e+00> : vector<8x32xf32>
    %218 = tpu.matmul %216, %217, %cst_96 {dimension_numbers = #tpu.dot_dimension_numbers<[1], [0], [0], [1], [0, 0, 1, 1], [], []>} : vector<8x4xf32>, vector<4x32xf32>, vector<8x32xf32> -> vector<8x32xf32>
    %219 = arith.addf %210, %218 : vector<8x32xf32>
    %220 = vector.broadcast %27 : vector<8x1xf32> to vector<8x32xf32>
    %221 = arith.mulf %219, %220 : vector<8x32xf32>
    %c1 = arith.constant 1 : index
    %c0_97 = arith.constant 0 : index
    %222 = vector.load %arg10[%c1, %c0_97] : memref<2x32xf32, #tpu.memory_space<vmem>>, vector<1x32xf32>
    %223 = vector.broadcast %222 : vector<1x32xf32> to vector<8x32xf32>
    %224 = arith.addf %221, %223 : vector<8x32xf32>
    %c1_98 = arith.constant 1 : index
    %c0_99 = arith.constant 0 : index
    %225 = vector.load %arg11[%c1_98, %c0_99] : memref<2x32xf32, #tpu.memory_space<vmem>>, vector<1x32xf32>
    %c1_100 = arith.constant 1 : index
    %c0_101 = arith.constant 0 : index
    %226 = vector.load %arg12[%c1_100, %c0_101] : memref<2x32xf32, #tpu.memory_space<vmem>>, vector<1x32xf32>
    %cst_102 = arith.constant dense<0.000000e+00> : vector<8xf32>
    %227 = vector.multi_reduction <add>, %224, %cst_102 [1] : vector<8x32xf32> to vector<8xf32>
    %228 = vector.shape_cast %227 : vector<8xf32> to vector<8x1xf32>
    %cst_103 = arith.constant 3.200000e+01 : f32
    %229 = vector.broadcast %cst_103 : f32 to vector<8x1xf32>
    %230 = arith.divf %228, %229 : vector<8x1xf32>
    %231 = vector.broadcast %230 : vector<8x1xf32> to vector<8x32xf32>
    %232 = arith.subf %224, %231 : vector<8x32xf32>
    %233 = arith.mulf %232, %232 : vector<8x32xf32>
    %cst_104 = arith.constant dense<0.000000e+00> : vector<8xf32>
    %234 = vector.multi_reduction <add>, %233, %cst_104 [1] : vector<8x32xf32> to vector<8xf32>
    %235 = vector.shape_cast %234 : vector<8xf32> to vector<8x1xf32>
    %cst_105 = arith.constant 3.200000e+01 : f32
    %236 = vector.broadcast %cst_105 : f32 to vector<8x1xf32>
    %237 = arith.divf %235, %236 : vector<8x1xf32>
    %238 = vector.broadcast %230 : vector<8x1xf32> to vector<8x32xf32>
    %239 = arith.subf %224, %238 : vector<8x32xf32>
    %cst_106 = arith.constant 9.99999974E-6 : f32
    %240 = vector.broadcast %cst_106 : f32 to vector<8x1xf32>
    %241 = arith.addf %237, %240 : vector<8x1xf32>
    %242 = math.rsqrt %241 : vector<8x1xf32>
    %243 = vector.broadcast %242 : vector<8x1xf32> to vector<8x32xf32>
    %244 = arith.mulf %239, %243 : vector<8x32xf32>
    %245 = vector.broadcast %225 : vector<1x32xf32> to vector<8x32xf32>
    %246 = arith.mulf %244, %245 : vector<8x32xf32>
    %247 = vector.broadcast %226 : vector<1x32xf32> to vector<8x32xf32>
    %248 = arith.addf %246, %247 : vector<8x32xf32>
    %249 = arith.negf %248 : vector<8x32xf32>
    %250 = math.exp %249 : vector<8x32xf32>
    %cst_107 = arith.constant 1.000000e+00 : f32
    %251 = vector.broadcast %cst_107 : f32 to vector<8x32xf32>
    %252 = arith.addf %251, %250 : vector<8x32xf32>
    %253 = arith.divf %251, %252 : vector<8x32xf32>
    %254 = arith.mulf %248, %253 : vector<8x32xf32>
    %255 = arith.addf %154, %254 : vector<8x32xf32>
    %c1_108 = arith.constant 1 : index
    %c0_109 = arith.constant 0 : index
    %256 = vector.load %arg13[%c1_108, %c0_109] : memref<2x32xf32, #tpu.memory_space<vmem>>, vector<1x32xf32>
    %c1_110 = arith.constant 1 : index
    %c0_111 = arith.constant 0 : index
    %257 = vector.load %arg14[%c1_110, %c0_111] : memref<2x32xf32, #tpu.memory_space<vmem>>, vector<1x32xf32>
    %cst_112 = arith.constant dense<0.000000e+00> : vector<8xf32>
    %258 = vector.multi_reduction <add>, %255, %cst_112 [1] : vector<8x32xf32> to vector<8xf32>
    %259 = vector.shape_cast %258 : vector<8xf32> to vector<8x1xf32>
    %cst_113 = arith.constant 3.200000e+01 : f32
    %260 = vector.broadcast %cst_113 : f32 to vector<8x1xf32>
    %261 = arith.divf %259, %260 : vector<8x1xf32>
    %262 = vector.broadcast %261 : vector<8x1xf32> to vector<8x32xf32>
    %263 = arith.subf %255, %262 : vector<8x32xf32>
    %264 = arith.mulf %263, %263 : vector<8x32xf32>
    %cst_114 = arith.constant dense<0.000000e+00> : vector<8xf32>
    %265 = vector.multi_reduction <add>, %264, %cst_114 [1] : vector<8x32xf32> to vector<8xf32>
    %266 = vector.shape_cast %265 : vector<8xf32> to vector<8x1xf32>
    %cst_115 = arith.constant 3.200000e+01 : f32
    %267 = vector.broadcast %cst_115 : f32 to vector<8x1xf32>
    %268 = arith.divf %266, %267 : vector<8x1xf32>
    %269 = vector.broadcast %261 : vector<8x1xf32> to vector<8x32xf32>
    %270 = arith.subf %255, %269 : vector<8x32xf32>
    %cst_116 = arith.constant 9.99999974E-6 : f32
    %271 = vector.broadcast %cst_116 : f32 to vector<8x1xf32>
    %272 = arith.addf %268, %271 : vector<8x1xf32>
    %273 = math.rsqrt %272 : vector<8x1xf32>
    %274 = vector.broadcast %273 : vector<8x1xf32> to vector<8x32xf32>
    %275 = arith.mulf %270, %274 : vector<8x32xf32>
    %276 = vector.broadcast %256 : vector<1x32xf32> to vector<8x32xf32>
    %277 = arith.mulf %275, %276 : vector<8x32xf32>
    %278 = vector.broadcast %257 : vector<1x32xf32> to vector<8x32xf32>
    %279 = arith.addf %277, %278 : vector<8x32xf32>
    %280 = tpu.iota {dimensions = array<i32: 0>} : vector<2x8xi32>
    %c0_117 = arith.constant 0 : index
    %c0_118 = arith.constant 0 : index
    %281 = vector.load %arg5[%c0_117, %c0_118] : memref<1x8xi32, #tpu.memory_space<vmem>>, vector<1x8xi32>
    %282 = vector.broadcast %281 : vector<1x8xi32> to vector<2x8xi32>
    %283 = arith.cmpi eq, %280, %282 : vector<2x8xi32>
    %cst_119 = arith.constant 1.000000e+00 : f32
    %cst_120 = arith.constant 0.000000e+00 : f32
    %284 = vector.broadcast %cst_119 : f32 to vector<2x8xf32>
    %285 = vector.broadcast %cst_120 : f32 to vector<2x8xf32>
    %286 = arith.select %283, %284, %285 : vector<2x8xi1>, vector<2x8xf32>
    %cst_121 = arith.constant dense<0.000000e+00> : vector<2x32xf32>
    %287 = tpu.matmul %286, %279, %cst_121 {dimension_numbers = #tpu.dot_dimension_numbers<[1], [0], [0], [1], [0, 0, 1, 1], [], []>} : vector<2x8xf32>, vector<8x32xf32>, vector<2x32xf32> -> vector<2x32xf32>
    %cst_122 = arith.constant dense<0.000000e+00> : vector<2xf32>
    %288 = vector.multi_reduction <add>, %286, %cst_122 [1] : vector<2x8xf32> to vector<2xf32>
    %289 = vector.shape_cast %288 : vector<2xf32> to vector<2x1xf32>
    %cst_123 = arith.constant 1.000000e+00 : f32
    %290 = vector.broadcast %cst_123 : f32 to vector<2x1xf32>
    %291 = arith.maximumf %289, %290 : vector<2x1xf32>
    %292 = vector.broadcast %291 : vector<2x1xf32> to vector<2x32xf32>
    %293 = arith.divf %287, %292 : vector<2x32xf32>
    %c0_124 = arith.constant 0 : index
    %c0_125 = arith.constant 0 : index
    %294 = vector.load %arg15[%c0_124, %c0_125] : memref<32x32xf32, #tpu.memory_space<vmem>>, vector<32x32xf32>
    %cst_126 = arith.constant dense<0.000000e+00> : vector<2x32xf32>
    %295 = tpu.matmul %293, %294, %cst_126 {dimension_numbers = #tpu.dot_dimension_numbers<[1], [0], [0], [1], [0, 0, 1, 1], [], []>} : vector<2x32xf32>, vector<32x32xf32>, vector<2x32xf32> -> vector<2x32xf32>
    %c0_127 = arith.constant 0 : index
    %c0_128 = arith.constant 0 : index
    %296 = vector.load %arg16[%c0_127, %c0_128] : memref<1x32xf32, #tpu.memory_space<vmem>>, vector<1x32xf32>
    %297 = vector.broadcast %296 : vector<1x32xf32> to vector<2x32xf32>
    %298 = arith.addf %295, %297 : vector<2x32xf32>
    %299 = arith.negf %298 : vector<2x32xf32>
    %300 = math.exp %299 : vector<2x32xf32>
    %cst_129 = arith.constant 1.000000e+00 : f32
    %301 = vector.broadcast %cst_129 : f32 to vector<2x32xf32>
    %302 = arith.addf %301, %300 : vector<2x32xf32>
    %303 = arith.divf %301, %302 : vector<2x32xf32>
    %304 = arith.mulf %298, %303 : vector<2x32xf32>
    %c0_130 = arith.constant 0 : index
    %c0_131 = arith.constant 0 : index
    %305 = vector.load %arg17[%c0_130, %c0_131] : memref<32x128xf32, #tpu.memory_space<vmem>>, vector<32x128xf32>
    %cst_132 = arith.constant dense<0.000000e+00> : vector<2x128xf32>
    %306 = tpu.matmul %304, %305, %cst_132 {dimension_numbers = #tpu.dot_dimension_numbers<[1], [0], [0], [1], [0, 0, 1, 1], [], []>} : vector<2x32xf32>, vector<32x128xf32>, vector<2x128xf32> -> vector<2x128xf32>
    %c0_133 = arith.constant 0 : index
    %c0_134 = arith.constant 0 : index
    %307 = vector.load %arg18[%c0_133, %c0_134] : memref<1x128xf32, #tpu.memory_space<vmem>>, vector<1x128xf32>
    %308 = vector.broadcast %307 : vector<1x128xf32> to vector<2x128xf32>
    %309 = arith.addf %306, %308 : vector<2x128xf32>
    %c0_135 = arith.constant 0 : index
    %c0_136 = arith.constant 0 : index
    %310 = vector.load %arg19[%c0_135, %c0_136] : memref<2x128xf32, #tpu.memory_space<vmem>>, vector<2x128xf32>
    tpu.vector_store %arg19[%c0_135, %c0_136], %309 {strides = array<i32>} : memref<2x128xf32, #tpu.memory_space<vmem>>, vector<2x128xf32>,
    return
  }
}

</mosaic_0001>

<llo_original>
// kernel: tpu_custom_call.1
$region0: #{tpu_custom_call.1}
  #allocation0 [shape = 'u32[]', space=smem, size = 0x4, offset = 0x4, fixed_abs, tag = 'smem constant byte address 0x4 - core index']
  #allocation1 [shape = 'u32[72,128]{1,0:T(1,128)}', space=vmem, size = 0x9000, scoped, tag = 'internal scratch']
  %s0 = inlined_call_operand.vmem [shape: f32[8,4], index: 0, kind: input, shape index: {}]
  %s1 = inlined_call_operand.vmem [shape: f32[8,4], index: 1, kind: input, shape index: {}]
  %s2 = inlined_call_operand.vmem [shape: f32[8,10], index: 2, kind: input, shape index: {}]
  %s3 = inlined_call_operand.vmem [shape: f32[10,8], index: 3, kind: input, shape index: {}]
  %s4 = inlined_call_operand.vmem [shape: s32[8,1], index: 4, kind: input, shape index: {}]
  %s5 = inlined_call_operand.vmem [shape: s32[1,8], index: 5, kind: input, shape index: {}]
  %s6 = inlined_call_operand.vmem [shape: f32[4,32], index: 6, kind: input, shape index: {}]
  %s7 = inlined_call_operand.vmem [shape: f32[80,10], index: 7, kind: input, shape index: {}]
  %s8 = inlined_call_operand.vmem [shape: f32[10,10], index: 8, kind: input, shape index: {}]
  %s9 = inlined_call_operand.vmem [shape: f32[32,32], index: 9, kind: input, shape index: {}]
  %s10 = inlined_call_operand.vmem [shape: f32[2,32], index: 10, kind: input, shape index: {}]
  %s11 = inlined_call_operand.vmem [shape: f32[2,32], index: 11, kind: input, shape index: {}]
  %s12 = inlined_call_operand.vmem [shape: f32[2,32], index: 12, kind: input, shape index: {}]
  %s13 = inlined_call_operand.vmem [shape: f32[2,32], index: 13, kind: input, shape index: {}]
  %s14 = inlined_call_operand.vmem [shape: f32[2,32], index: 14, kind: input, shape index: {}]
  %s15 = inlined_call_operand.vmem [shape: f32[32,32], index: 15, kind: input, shape index: {}]
  %s16 = inlined_call_operand.vmem [shape: f32[1,32], index: 16, kind: input, shape index: {}]
  %s17 = inlined_call_operand.vmem [shape: f32[32,128], index: 17, kind: input, shape index: {}]
  %s18 = inlined_call_operand.vmem [shape: f32[1,128], index: 18, kind: input, shape index: {}]
  %s19 = inlined_call_operand.hbm [shape: f32[2,128], index: 19, kind: output, shape index: {}]
  %s20 = sld [smem:[#allocation0]]
  $region86: #{tpu_custom_call.1} parent=0
    _
  %s22 = ssub.s32 1, %s20
  %s23 = scalar_select 0, %s22, %s20
  $region1: #{tpu_custom_call.1} parent=0
    #allocation2 [shape = 'u8[1024]{0}', space=vmem, size = 0x400, scoped, tag = 'output window, operand 0, single buffered']
    #allocation3 [shape = 's32[1]{0}', space=sflag, size = 0x4, scoped, tag = 'scoped memory for tpu_custom_call.1']
    %24 = vsyncpa [#allocation3], 0
    // Predicated region
    $region2: #{tpu_custom_call.1} parent=1 // pred_check
      _
    $region3: #{tpu_custom_call.1} parent=1 // pred_check_branch
      %26 = sbr.rel (0) target = $region5
    $region4: #{tpu_custom_call.1} parent=1 // pred_region
      _
    $region5: #{tpu_custom_call.1} parent=1 // pred_fallthru
      _
    // Predicated region
    $region6: #{tpu_custom_call.1} parent=1 // pred_check
      _
    $region7: #{tpu_custom_call.1} parent=1 // pred_check_branch
      %28 = sbr.rel (0) target = $region9
    $region8: #{tpu_custom_call.1} parent=1 // pred_region
      _
    $region9: #{tpu_custom_call.1} parent=1 // pred_fallthru
      _
    // Predicated region
    $region10: #{tpu_custom_call.1} parent=1 // pred_check
      _
    $region11: #{tpu_custom_call.1} parent=1 // pred_check_branch
      %30 = sbr.rel (0) target = $region13
    $region12: #{tpu_custom_call.1} parent=1 // pred_region
      _
    $region13: #{tpu_custom_call.1} parent=1 // pred_fallthru
      _
    // Predicated region
    $region14: #{tpu_custom_call.1} parent=1 // pred_check
      _
    $region15: #{tpu_custom_call.1} parent=1 // pred_check_branch
      %32 = sbr.rel (0) target = $region17
    $region16: #{tpu_custom_call.1} parent=1 // pred_region
      _
    $region17: #{tpu_custom_call.1} parent=1 // pred_fallthru
      _
    // Predicated region
    $region18: #{tpu_custom_call.1} parent=1 // pred_check
      _
    $region19: #{tpu_custom_call.1} parent=1 // pred_check_branch
      %34 = sbr.rel (0) target = $region21
    $region20: #{tpu_custom_call.1} parent=1 // pred_region
      _
    $region21: #{tpu_custom_call.1} parent=1 // pred_fallthru
      _
    // Predicated region
    $region22: #{tpu_custom_call.1} parent=1 // pred_check
      _
    $region23: #{tpu_custom_call.1} parent=1 // pred_check_branch
      %36 = sbr.rel (0) target = $region25
    $region24: #{tpu_custom_call.1} parent=1 // pred_region
      _
    $region25: #{tpu_custom_call.1} parent=1 // pred_fallthru
      _
    // Predicated region
    $region26: #{tpu_custom_call.1} parent=1 // pred_check
      _
    $region27: #{tpu_custom_call.1} parent=1 // pred_check_branch
      %38 = sbr.rel (0) target = $region29
    $region28: #{tpu_custom_call.1} parent=1 // pred_region
      _
    $region29: #{tpu_custom_call.1} parent=1 // pred_fallthru
      _
    // Predicated region
    $region30: #{tpu_custom_call.1} parent=1 // pred_check
      _
    $region31: #{tpu_custom_call.1} parent=1 // pred_check_branch
      %40 = sbr.rel (0) target = $region33
    $region32: #{tpu_custom_call.1} parent=1 // pred_region
      _
    $region33: #{tpu_custom_call.1} parent=1 // pred_fallthru
      _
    // Predicated region
    $region34: #{tpu_custom_call.1} parent=1 // pred_check
      _
    $region35: #{tpu_custom_call.1} parent=1 // pred_check_branch
      %42 = sbr.rel (0) target = $region37
    $region36: #{tpu_custom_call.1} parent=1 // pred_region
      _
    $region37: #{tpu_custom_call.1} parent=1 // pred_fallthru
      _
    // Predicated region
    $region38: #{tpu_custom_call.1} parent=1 // pred_check
      _
    $region39: #{tpu_custom_call.1} parent=1 // pred_check_branch
      %44 = sbr.rel (0) target = $region41
    $region40: #{tpu_custom_call.1} parent=1 // pred_region
      _
    $region41: #{tpu_custom_call.1} parent=1 // pred_fallthru
      _
    // Predicated region
    $region42: #{tpu_custom_call.1} parent=1 // pred_check
      _
    $region43: #{tpu_custom_call.1} parent=1 // pred_check_branch
      %46 = sbr.rel (0) target = $region45
    $region44: #{tpu_custom_call.1} parent=1 // pred_region
      _
    $region45: #{tpu_custom_call.1} parent=1 // pred_fallthru
      _
    // Predicated region
    $region46: #{tpu_custom_call.1} parent=1 // pred_check
      _
    $region47: #{tpu_custom_call.1} parent=1 // pred_check_branch
      %48 = sbr.rel (0) target = $region49
    $region48: #{tpu_custom_call.1} parent=1 // pred_region
      _
    $region49: #{tpu_custom_call.1} parent=1 // pred_fallthru
      _
    // Predicated region
    $region50: #{tpu_custom_call.1} parent=1 // pred_check
      _
    $region51: #{tpu_custom_call.1} parent=1 // pred_check_branch
      %50 = sbr.rel (0) target = $region53
    $region52: #{tpu_custom_call.1} parent=1 // pred_region
      _
    $region53: #{tpu_custom_call.1} parent=1 // pred_fallthru
      _
    // Predicated region
    $region54: #{tpu_custom_call.1} parent=1 // pred_check
      _
    $region55: #{tpu_custom_call.1} parent=1 // pred_check_branch
      %52 = sbr.rel (0) target = $region57
    $region56: #{tpu_custom_call.1} parent=1 // pred_region
      _
    $region57: #{tpu_custom_call.1} parent=1 // pred_fallthru
      _
    // Predicated region
    $region58: #{tpu_custom_call.1} parent=1 // pred_check
      _
    $region59: #{tpu_custom_call.1} parent=1 // pred_check_branch
      %54 = sbr.rel (0) target = $region61
    $region60: #{tpu_custom_call.1} parent=1 // pred_region
      _
    $region61: #{tpu_custom_call.1} parent=1 // pred_fallthru
      _
    // Predicated region
    $region62: #{tpu_custom_call.1} parent=1 // pred_check
      _
    $region63: #{tpu_custom_call.1} parent=1 // pred_check_branch
      %56 = sbr.rel (0) target = $region65
    $region64: #{tpu_custom_call.1} parent=1 // pred_region
      _
    $region65: #{tpu_custom_call.1} parent=1 // pred_fallthru
      _
    // Predicated region
    $region66: #{tpu_custom_call.1} parent=1 // pred_check
      _
    $region67: #{tpu_custom_call.1} parent=1 // pred_check_branch
      %58 = sbr.rel (0) target = $region69
    $region68: #{tpu_custom_call.1} parent=1 // pred_region
      _
    $region69: #{tpu_custom_call.1} parent=1 // pred_fallthru
      _
    // Predicated region
    $region70: #{tpu_custom_call.1} parent=1 // pred_check
      _
    $region71: #{tpu_custom_call.1} parent=1 // pred_check_branch
      %60 = sbr.rel (0) target = $region73
    $region72: #{tpu_custom_call.1} parent=1 // pred_region
      _
    $region73: #{tpu_custom_call.1} parent=1 // pred_fallthru
      _
    // Predicated region
    $region74: #{tpu_custom_call.1} parent=1 // pred_check
      _
    $region75: #{tpu_custom_call.1} parent=1 // pred_check_branch
      %62 = sbr.rel (0) target = $region77
    $region76: #{tpu_custom_call.1} parent=1 // pred_region
      _
    $region77: #{tpu_custom_call.1} parent=1 // pred_fallthru
      _
    %v63 = vld [vmem:[%s0] sm:$0xff]
    %v64 = vld [vmem:[%s1] sm:$0xff]
    %v65 = vld [vmem:[%s2] sm:$0xff]
    %v66 = vld [vmem:[%s3] sm:$0xff]
    %v67 = vld [vmem:[%s3 + $0x8] sm:$0x3]
    %v68 = vld [vmem:[%s8] sm:$0xff]
    %v69 = vld [vmem:[%s8 + $0x8] sm:$0x3]
    %vm70 = vcmask 80896
    %v72 = vsel %vm70, %v65, 0
    %vm74 = vcmask 1041408
    %v76 = vsel %vm74, %v69, 0
    %78 = vmatpush.msra.mxu0 0.0
    %79 = vmatpush.msra.mxu0 0.0
    %80 = vmatpush.msra.mxu0 0.0
    %81 = vmatpush.msra.mxu0 0.0
    %82 = vmatpush.msra.mxu0 0.0
    %83 = vmatpush.msra.mxu0 0.0
    %84 = vmatpush.msra.mxu0 0.0
    %85 = vmatpush.msra.mxu0 0.0
    %86 = vmatpush.msra.mxu0 0.0
    %87 = vmatpush.msra.mxu0 0.0
    %88 = vmatpush.msra.mxu0 0.0
    %89 = vmatpush.msra.mxu0 0.0
    %90 = vmatpush.msra.mxu0 0.0
    %91 = vmatpush.msra.mxu0 0.0
    %92 = vmatpush.msra.mxu0 %v76
    %93 = vmatpush.msra.mxu0 %v68
    %94 = vmatmul.f32.gmra.mxu0 %v72
    %v95 = vpop.f32.mrf.mxu0
    %v96 = vadd.f32 0.0, %v95
    %97 = vdwg.mxu0
    %v99 = vsel %vm70, %v96, 0
    %v102 = vsel %vm74, %v67, 0
    %104 = vmatpush.msra.mxu0 0.0
    %105 = vmatpush.msra.mxu0 0.0
    %106 = vmatpush.msra.mxu0 0.0
    %107 = vmatpush.msra.mxu0 0.0
    %108 = vmatpush.msra.mxu0 0.0
    %109 = vmatpush.msra.mxu0 0.0
    %110 = vmatpush.msra.mxu0 0.0
    %111 = vmatpush.msra.mxu0 0.0
    %112 = vmatpush.msra.mxu0 0.0
    %113 = vmatpush.msra.mxu0 0.0
    %114 = vmatpush.msra.mxu0 0.0
    %115 = vmatpush.msra.mxu0 0.0
    %116 = vmatpush.msra.mxu0 0.0
    %117 = vmatpush.msra.mxu0 0.0
    %118 = vmatpush.msra.mxu0 %v102
    %119 = vmatpush.msra.mxu0 %v66
    %120 = vmatmul.f32.gmra.mxu0 %v99
    %v121 = vpop.f32.mrf.mxu0
    %v122 = vadd.f32 0.0, %v121
    %123 = vdwg.mxu0
    %v124 = vld [vmem:[%s4] sm:$0xff]
    %v125 = vld [vmem:[%s5] sm:$0x1]
    %126 = vset.pattern.permute.xlu0 0
    %127 = vperm.xlu0 %126, %v124
    %v128 = vpop.permute.xlu0 %127
    %v129 = vperm.slane %v125, 0
    %vm130 = vcmp.eq.s32.totalorder %v128, %v129
    %v131 = vlaneseq
    %v132 = vshrl.u32 %v131, 7
    %v133 = vlaneseq
    %v134 = vand.u32 %v133, 127
    %vm135 = vcmp.ne.s32.totalorder %v132, %v134
    %vm136 = vmand %vm130, %vm135
    %vm137 = vcmp.le.f32.partialorder %v122, 3.24
    %vm138 = vmand %vm136, %vm137
    %v139 = vsel %vm138, 1.0, 0.0
    %vm140 = vcmask 64512
    %v141 = vsel %vm140, %v139, 0.0
    %142 = vadd.xlane.f32.xlu0 %v141
    %v143 = vpop.xlane.xlu0 %142
    %v144 = vmax.f32 %v143, 1.0
    %v145 = vrcp.pop %v144
    %v146 = vmul.f32 %v144, %v145
    %v147 = vsub.f32 1.0, %v146
    %v148 = vmul.f32 %v145, %v147
    %v149 = vadd.f32 %v145, %v148
    %vm150 = vweird.f32 %v144
    %vm151 = vweird.f32 %v145
    %vm152 = vmor %vm150, %vm151
    %v153 = vsel %vm152, %v145, %v149
    %v154 = vand.u32 2147483647, %v144
    %vm155 = vcmp.eq.f32.partialorder %v154, 8.507059e+37
    %v156 = vand.u32 %v144, 2147483648
    %v157 = vor.u32 1.1754944e-38, %v156
    %v158 = vsel %vm155, %v157, %v153
    %v159 = vmul.f32 1.0, %v158
    %v160 = vld [vmem:[%s6] sm:$0xf]
    %v161 = vld [vmem:[%s7] sm:$0xff]
    %v162 = vld [vmem:[%s7 + $0x8] sm:$0x3]
    %v164 = vsel %vm74, %v162, 0
    %166 = vmatpush.msra.mxu0 0.0
    %167 = vmatpush.msra.mxu0 0.0
    %168 = vmatpush.msra.mxu0 0.0
    %169 = vmatpush.msra.mxu0 0.0
    %170 = vmatpush.msra.mxu0 0.0
    %171 = vmatpush.msra.mxu0 0.0
    %172 = vmatpush.msra.mxu0 0.0
    %173 = vmatpush.msra.mxu0 0.0
    %174 = vmatpush.msra.mxu0 0.0
    %175 = vmatpush.msra.mxu0 0.0
    %176 = vmatpush.msra.mxu0 0.0
    %177 = vmatpush.msra.mxu0 0.0
    %178 = vmatpush.msra.mxu0 0.0
    %179 = vmatpush.msra.mxu0 0.0
    %180 = vmatpush.msra.mxu0 %v164
    %181 = vmatpush.msra.mxu0 %v161
    %182 = vmatmul.f32.gmra.mxu0 %v72
    %v183 = vpop.f32.mrf.mxu0
    %v184 = vadd.f32 0.0, %v183
    %185 = vdwg.mxu0
    %v187 = vsel %vm70, %v184, 0
    %189 = vmatpush.msra.mxu0 0.0
    %190 = vmatpush.msra.mxu0 0.0
    %191 = vmatpush.msra.mxu0 0.0
    %192 = vmatpush.msra.mxu0 0.0
    %193 = vmatpush.msra.mxu0 0.0
    %194 = vmatpush.msra.mxu0 0.0
    %195 = vmatpush.msra.mxu0 0.0
    %196 = vmatpush.msra.mxu0 0.0
    %197 = vmatpush.msra.mxu0 0.0
    %198 = vmatpush.msra.mxu0 0.0
    %199 = vmatpush.msra.mxu0 0.0
    %200 = vmatpush.msra.mxu0 0.0
    %201 = vmatpush.msra.mxu0 0.0
    %202 = vmatpush.msra.mxu0 0.0
    %203 = vmatpush.msra.mxu0 %v102
    %204 = vmatpush.msra.mxu0 %v66
    %205 = vmatmul.f32.gmra.mxu0 %v187
    %v206 = vpop.f32.mrf.mxu0
    %v207 = vadd.f32 0.0, %v206
    %208 = vdwg.mxu0
    %v209 = vld [vmem:[%s7 + $0xa] sm:$0xff]
    %v210 = vld [vmem:[%s7 + $0x12] sm:$0x3]
    %v212 = vsel %vm74, %v210, 0
    %214 = vmatpush.msra.mxu0 0.0
    %215 = vmatpush.msra.mxu0 0.0
    %216 = vmatpush.msra.mxu0 0.0
    %217 = vmatpush.msra.mxu0 0.0
    %218 = vmatpush.msra.mxu0 0.0
    %219 = vmatpush.msra.mxu0 0.0
    %220 = vmatpush.msra.mxu0 0.0
    %221 = vmatpush.msra.mxu0 0.0
    %222 = vmatpush.msra.mxu0 0.0
    %223 = vmatpush.msra.mxu0 0.0
    %224 = vmatpush.msra.mxu0 0.0
    %225 = vmatpush.msra.mxu0 0.0
    %226 = vmatpush.msra.mxu0 0.0
    %227 = vmatpush.msra.mxu0 0.0
    %228 = vmatpush.msra.mxu0 %v212
    %229 = vmatpush.msra.mxu0 %v209
    %230 = vmatmul.f32.gmra.mxu0 %v72
    %v231 = vpop.f32.mrf.mxu0
    %v232 = vadd.f32 0.0, %v231
    %233 = vdwg.mxu0
    %v235 = vsel %vm70, %v232, 0
    %237 = vmatpush.msra.mxu0 0.0
    %238 = vmatpush.msra.mxu0 0.0
    %239 = vmatpush.msra.mxu0 0.0
    %240 = vmatpush.msra.mxu0 0.0
    %241 = vmatpush.msra.mxu0 0.0
    %242 = vmatpush.msra.mxu0 0.0
    %243 = vmatpush.msra.mxu0 0.0
    %244 = vmatpush.msra.mxu0 0.0
    %245 = vmatpush.msra.mxu0 0.0
    %246 = vmatpush.msra.mxu0 0.0
    %247 = vmatpush.msra.mxu0 0.0
    %248 = vmatpush.msra.mxu0 0.0
    %249 = vmatpush.msra.mxu0 0.0
    %250 = vmatpush.msra.mxu0 0.0
    %251 = vmatpush.msra.mxu0 %v102
    %252 = vmatpush.msra.mxu0 %v66
    %253 = vmatmul.f32.gmra.mxu0 %v235
    %v254 = vpop.f32.mrf.mxu0
    %v255 = vadd.f32 0.0, %v254
    %256 = vdwg.mxu0
    %v257 = vld [vmem:[%s7 + $0x14] sm:$0xff]
    %v258 = vld [vmem:[%s7 + $0x1c] sm:$0x3]
    %v260 = vsel %vm74, %v258, 0
    %262 = vmatpush.msra.mxu0 0.0
    %263 = vmatpush.msra.mxu0 0.0
    %264 = vmatpush.msra.mxu0 0.0
    %265 = vmatpush.msra.mxu0 0.0
    %266 = vmatpush.msra.mxu0 0.0
    %267 = vmatpush.msra.mxu0 0.0
    %268 = vmatpush.msra.mxu0 0.0
    %269 = vmatpush.msra.mxu0 0.0
    %270 = vmatpush.msra.mxu0 0.0
    %271 = vmatpush.msra.mxu0 0.0
    %272 = vmatpush.msra.mxu0 0.0
    %273 = vmatpush.msra.mxu0 0.0
    %274 = vmatpush.msra.mxu0 0.0
    %275 = vmatpush.msra.mxu0 0.0
    %276 = vmatpush.msra.mxu0 %v260
    %277 = vmatpush.msra.mxu0 %v257
    %278 = vmatmul.f32.gmra.mxu0 %v72
    %v279 = vpop.f32.mrf.mxu0
    %v280 = vadd.f32 0.0, %v279
    %281 = vdwg.mxu0
    %v283 = vsel %vm70, %v280, 0
    %285 = vmatpush.msra.mxu0 0.0
    %286 = vmatpush.msra.mxu0 0.0
    %287 = vmatpush.msra.mxu0 0.0
    %288 = vmatpush.msra.mxu0 0.0
    %289 = vmatpush.msra.mxu0 0.0
    %290 = vmatpush.msra.mxu0 0.0
    %291 = vmatpush.msra.mxu0 0.0
    %292 = vmatpush.msra.mxu0 0.0
    %293 = vmatpush.msra.mxu0 0.0
    %294 = vmatpush.msra.mxu0 0.0
    %295 = vmatpush.msra.mxu0 0.0
    %296 = vmatpush.msra.mxu0 0.0
    %297 = vmatpush.msra.mxu0 0.0
    %298 = vmatpush.msra.mxu0 0.0
    %299 = vmatpush.msra.mxu0 %v102
    %300 = vmatpush.msra.mxu0 %v66
    %301 = vmatmul.f32.gmra.mxu0 %v283
    %v302 = vpop.f32.mrf.mxu0
    %v303 = vadd.f32 0.0, %v302
    %304 = vdwg.mxu0
    %v305 = vld [vmem:[%s7 + $0x1e] sm:$0xff]
    %v306 = vld [vmem:[%s7 + $0x26] sm:$0x3]
    %v308 = vsel %vm74, %v306, 0
    %310 = vmatpush.msra.mxu0 0.0
    %311 = vmatpush.msra.mxu0 0.0
    %312 = vmatpush.msra.mxu0 0.0
    %313 = vmatpush.msra.mxu0 0.0
    %314 = vmatpush.msra.mxu0 0.0
    %315 = vmatpush.msra.mxu0 0.0
    %316 = vmatpush.msra.mxu0 0.0
    %317 = vmatpush.msra.mxu0 0.0
    %318 = vmatpush.msra.mxu0 0.0
    %319 = vmatpush.msra.mxu0 0.0
    %320 = vmatpush.msra.mxu0 0.0
    %321 = vmatpush.msra.mxu0 0.0
    %322 = vmatpush.msra.mxu0 0.0
    %323 = vmatpush.msra.mxu0 0.0
    %324 = vmatpush.msra.mxu0 %v308
    %325 = vmatpush.msra.mxu0 %v305
    %326 = vmatmul.f32.gmra.mxu0 %v72
    %v327 = vpop.f32.mrf.mxu0
    %v328 = vadd.f32 0.0, %v327
    %329 = vdwg.mxu0
    %v331 = vsel %vm70, %v328, 0
    %333 = vmatpush.msra.mxu0 0.0
    %334 = vmatpush.msra.mxu0 0.0
    %335 = vmatpush.msra.mxu0 0.0
    %336 = vmatpush.msra.mxu0 0.0
    %337 = vmatpush.msra.mxu0 0.0
    %338 = vmatpush.msra.mxu0 0.0
    %339 = vmatpush.msra.mxu0 0.0
    %340 = vmatpush.msra.mxu0 0.0
    %341 = vmatpush.msra.mxu0 0.0
    %342 = vmatpush.msra.mxu0 0.0
    %343 = vmatpush.msra.mxu0 0.0
    %344 = vmatpush.msra.mxu0 0.0
    %345 = vmatpush.msra.mxu0 0.0
    %346 = vmatpush.msra.mxu0 0.0
    %347 = vmatpush.msra.mxu0 %v102
    %348 = vmatpush.msra.mxu0 %v66
    %349 = vmatmul.f32.gmra.mxu0 %v331
    %v350 = vpop.f32.mrf.mxu0
    %v351 = vadd.f32 0.0, %v350
    %352 = vdwg.mxu0
    %v353 = vmax.f32 %v207, %v255
    %v354 = vmax.f32 %v353, %v303
    %v355 = vmax.f32 %v354, %v351
    %v356 = vsub.f32 %v207, %v355
    %v357 = vmul.f32 %v356, 1.442695
    %v358 = vpow.pop %v357
    %v359 = vsub.f32 %v255, %v355
    %v360 = vmul.f32 %v359, 1.442695
    %v361 = vpow.pop %v360
    %v362 = vsub.f32 %v303, %v355
    %v363 = vmul.f32 %v362, 1.442695
    %v364 = vpow.pop %v363
    %v365 = vsub.f32 %v351, %v355
    %v366 = vmul.f32 %v365, 1.442695
    %v367 = vpow.pop %v366
    %v368 = vadd.f32 %v358, %v361
    %v369 = vadd.f32 %v368, %v364
    %v370 = vadd.f32 %v369, %v367
    %v371 = vrcp.pop %v370
    %v372 = vmul.f32 %v139, %v371
    %v373 = vmul.f32 %v358, %v372
    %v375 = vsel %vm140, %v373, 0
    %377 = vmatpush.msra.mxu0 0.0
    %378 = vmatpush.msra.mxu0 0.0
    %379 = vmatpush.msra.mxu0 0.0
    %380 = vmatpush.msra.mxu0 0.0
    %381 = vmatpush.msra.mxu0 0.0
    %382 = vmatpush.msra.mxu0 0.0
    %383 = vmatpush.msra.mxu0 0.0
    %384 = vmatpush.msra.mxu0 0.0
    %385 = vmatpush.msra.mxu0 0.0
    %386 = vmatpush.msra.mxu0 0.0
    %387 = vmatpush.msra.mxu0 0.0
    %388 = vmatpush.msra.mxu0 0.0
    %389 = vmatpush.msra.mxu0 0.0
    %390 = vmatpush.msra.mxu0 0.0
    %391 = vmatpush.msra.mxu0 0.0
    %392 = vmatpush.msra.mxu0 %v63
    %393 = vmatmul.f32.gmra.mxu0 %v375
    %v394 = vpop.f32.mrf.mxu0
    %v395 = vadd.f32 0.0, %v394
    %396 = vdwg.mxu0
    %398 = vset.pattern.permute.xlu0 3
    %399 = vperm.xlu0 %398, %v395
    %v400 = vpop.permute.xlu0 %399
    %v402 = vmul.f32 %v64, %v400
    %v403 = vsub.f32 %v395, %v402
    %v404 = vld [vmem:[%s9] sm:$0xf]
    %v405 = vmul.f32 %v361, %v372
    %v407 = vsel %vm140, %v405, 0
    %409 = vmatpush.msra.mxu0 0.0
    %410 = vmatpush.msra.mxu0 0.0
    %411 = vmatpush.msra.mxu0 0.0
    %412 = vmatpush.msra.mxu0 0.0
    %413 = vmatpush.msra.mxu0 0.0
    %414 = vmatpush.msra.mxu0 0.0
    %415 = vmatpush.msra.mxu0 0.0
    %416 = vmatpush.msra.mxu0 0.0
    %417 = vmatpush.msra.mxu0 0.0
    %418 = vmatpush.msra.mxu0 0.0
    %419 = vmatpush.msra.mxu0 0.0
    %420 = vmatpush.msra.mxu0 0.0
    %421 = vmatpush.msra.mxu0 0.0
    %422 = vmatpush.msra.mxu0 0.0
    %423 = vmatpush.msra.mxu0 0.0
    %424 = vmatpush.msra.mxu0 %v63
    %425 = vmatmul.f32.gmra.mxu0 %v407
    %v426 = vpop.f32.mrf.mxu0
    %v427 = vadd.f32 0.0, %v426
    %428 = vdwg.mxu0
    %430 = vset.pattern.permute.xlu0 3
    %431 = vperm.xlu0 %430, %v427
    %v432 = vpop.permute.xlu0 %431
    %v434 = vmul.f32 %v64, %v432
    %v435 = vsub.f32 %v427, %v434
    %v436 = vld [vmem:[%s9 + $0x4] sm:$0xf]
    %vm437 = vcmask 31744
    %v439 = vsel %vm437, %v435, 0
    %vm441 = vcmask 1043456
    %v443 = vsel %vm441, %v436, 0
    %445 = vmatpush.msra.mxu0 0.0
    %446 = vmatpush.msra.mxu0 0.0
    %447 = vmatpush.msra.mxu0 0.0
    %448 = vmatpush.msra.mxu0 0.0
    %449 = vmatpush.msra.mxu0 0.0
    %450 = vmatpush.msra.mxu0 0.0
    %451 = vmatpush.msra.mxu0 0.0
    %452 = vmatpush.msra.mxu0 0.0
    %453 = vmatpush.msra.mxu0 0.0
    %454 = vmatpush.msra.mxu0 0.0
    %455 = vmatpush.msra.mxu0 0.0
    %456 = vmatpush.msra.mxu0 0.0
    %457 = vmatpush.msra.mxu0 0.0
    %458 = vmatpush.msra.mxu0 0.0
    %459 = vmatpush.msra.mxu0 0.0
    %460 = vmatpush.msra.mxu0 %v443
    %461 = vmatmul.f32.gmra.mxu0 %v439
    %v462 = vpop.f32.mrf.mxu0
    %v463 = vadd.f32 0.0, %v462
    %464 = vdwg.mxu0
    %v466 = vsel %vm437, %v403, 0
    %v469 = vsel %vm441, %v404, 0
    %471 = vmatpush.msra.mxu0 0.0
    %472 = vmatpush.msra.mxu0 0.0
    %473 = vmatpush.msra.mxu0 0.0
    %474 = vmatpush.msra.mxu0 0.0
    %475 = vmatpush.msra.mxu0 0.0
    %476 = vmatpush.msra.mxu0 0.0
    %477 = vmatpush.msra.mxu0 0.0
    %478 = vmatpush.msra.mxu0 0.0
    %479 = vmatpush.msra.mxu0 0.0
    %480 = vmatpush.msra.mxu0 0.0
    %481 = vmatpush.msra.mxu0 0.0
    %482 = vmatpush.msra.mxu0 0.0
    %483 = vmatpush.msra.mxu0 0.0
    %484 = vmatpush.msra.mxu0 0.0
    %485 = vmatpush.msra.mxu0 0.0
    %486 = vmatpush.msra.mxu0 %v469
    %487 = vmatmul.f32.gmra.mxu0 %v466
    %v488 = vpop.f32.mrf.mxu0
    %v489 = vadd.f32 %v463, %v488
    %490 = vdwg.mxu0
    %v491 = vmul.f32 %v364, %v372
    %v493 = vsel %vm140, %v491, 0
    %495 = vmatpush.msra.mxu0 0.0
    %496 = vmatpush.msra.mxu0 0.0
    %497 = vmatpush.msra.mxu0 0.0
    %498 = vmatpush.msra.mxu0 0.0
    %499 = vmatpush.msra.mxu0 0.0
    %500 = vmatpush.msra.mxu0 0.0
    %501 = vmatpush.msra.mxu0 0.0
    %502 = vmatpush.msra.mxu0 0.0
    %503 = vmatpush.msra.mxu0 0.0
    %504 = vmatpush.msra.mxu0 0.0
    %505 = vmatpush.msra.mxu0 0.0
    %506 = vmatpush.msra.mxu0 0.0
    %507 = vmatpush.msra.mxu0 0.0
    %508 = vmatpush.msra.mxu0 0.0
    %509 = vmatpush.msra.mxu0 0.0
    %510 = vmatpush.msra.mxu0 %v63
    %511 = vmatmul.f32.gmra.mxu0 %v493
    %v512 = vpop.f32.mrf.mxu0
    %v513 = vadd.f32 0.0, %v512
    %514 = vdwg.mxu0
    %516 = vset.pattern.permute.xlu0 3
    %517 = vperm.xlu0 %516, %v513
    %v518 = vpop.permute.xlu0 %517
    %v520 = vmul.f32 %v64, %v518
    %v521 = vsub.f32 %v513, %v520
    %v522 = vld [vmem:[%s9 + $0x8] sm:$0xf]
    %v524 = vsel %vm437, %v521, 0
    %v527 = vsel %vm441, %v522, 0
    %529 = vmatpush.msra.mxu0 0.0
    %530 = vmatpush.msra.mxu0 0.0
    %531 = vmatpush.msra.mxu0 0.0
    %532 = vmatpush.msra.mxu0 0.0
    %533 = vmatpush.msra.mxu0 0.0
    %534 = vmatpush.msra.mxu0 0.0
    %535 = vmatpush.msra.mxu0 0.0
    %536 = vmatpush.msra.mxu0 0.0
    %537 = vmatpush.msra.mxu0 0.0
    %538 = vmatpush.msra.mxu0 0.0
    %539 = vmatpush.msra.mxu0 0.0
    %540 = vmatpush.msra.mxu0 0.0
    %541 = vmatpush.msra.mxu0 0.0
    %542 = vmatpush.msra.mxu0 0.0
    %543 = vmatpush.msra.mxu0 0.0
    %544 = vmatpush.msra.mxu0 %v527
    %545 = vmatmul.f32.gmra.mxu0 %v524
    %v546 = vpop.f32.mrf.mxu0
    %v547 = vadd.f32 0.0, %v546
    %548 = vdwg.mxu0
    %v549 = vadd.f32 %v489, %v547
    %v550 = vmul.f32 %v367, %v372
    %v552 = vsel %vm140, %v550, 0
    %554 = vmatpush.msra.mxu0 0.0
    %555 = vmatpush.msra.mxu0 0.0
    %556 = vmatpush.msra.mxu0 0.0
    %557 = vmatpush.msra.mxu0 0.0
    %558 = vmatpush.msra.mxu0 0.0
    %559 = vmatpush.msra.mxu0 0.0
    %560 = vmatpush.msra.mxu0 0.0
    %561 = vmatpush.msra.mxu0 0.0
    %562 = vmatpush.msra.mxu0 0.0
    %563 = vmatpush.msra.mxu0 0.0
    %564 = vmatpush.msra.mxu0 0.0
    %565 = vmatpush.msra.mxu0 0.0
    %566 = vmatpush.msra.mxu0 0.0
    %567 = vmatpush.msra.mxu0 0.0
    %568 = vmatpush.msra.mxu0 0.0
    %569 = vmatpush.msra.mxu0 %v63
    %570 = vmatmul.f32.gmra.mxu0 %v552
    %v571 = vpop.f32.mrf.mxu0
    %v572 = vadd.f32 0.0, %v571
    %573 = vdwg.mxu0
    %575 = vset.pattern.permute.xlu0 3
    %576 = vperm.xlu0 %575, %v572
    %v577 = vpop.permute.xlu0 %576
    %v579 = vmul.f32 %v64, %v577
    %v580 = vsub.f32 %v572, %v579
    %v581 = vld [vmem:[%s9 + $0xc] sm:$0xf]
    %v583 = vsel %vm437, %v580, 0
    %v586 = vsel %vm441, %v581, 0
    %588 = vmatpush.msra.mxu0 0.0
    %589 = vmatpush.msra.mxu0 0.0
    %590 = vmatpush.msra.mxu0 0.0
    %591 = vmatpush.msra.mxu0 0.0
    %592 = vmatpush.msra.mxu0 0.0
    %593 = vmatpush.msra.mxu0 0.0
    %594 = vmatpush.msra.mxu0 0.0
    %595 = vmatpush.msra.mxu0 0.0
    %596 = vmatpush.msra.mxu0 0.0
    %597 = vmatpush.msra.mxu0 0.0
    %598 = vmatpush.msra.mxu0 0.0
    %599 = vmatpush.msra.mxu0 0.0
    %600 = vmatpush.msra.mxu0 0.0
    %601 = vmatpush.msra.mxu0 0.0
    %602 = vmatpush.msra.mxu0 0.0
    %603 = vmatpush.msra.mxu0 %v586
    %604 = vmatmul.f32.gmra.mxu0 %v583
    %v605 = vpop.f32.mrf.mxu0
    %v606 = vadd.f32 0.0, %v605
    %607 = vdwg.mxu0
    %v608 = vadd.f32 %v549, %v606
    %v609 = vmul.f32 %v608, %v159
    %v610 = vld [vmem:[%s10] sm:$0x1]
    %v611 = vperm.slane %v610, 0
    %v612 = vadd.f32 %v609, %v611
    %v613 = vld [vmem:[%s11] sm:$0x1]
    %v614 = vld [vmem:[%s12] sm:$0x1]
    %vm615 = vcmask 261120
    %v616 = vsel %vm615, %v612, 0.0
    %617 = vadd.xlane.f32.xlu0 %v616
    %v618 = vpop.xlane.xlu0 %617
    %v619 = vrcp.pop 32.0
    %v620 = vmul.f32 32.0, %v619
    %v621 = vsub.f32 1.0, %v620
    %v622 = vmul.f32 %v619, %v621
    %v623 = vadd.f32 %v619, %v622
    %vm624 = vweird.f32 %v619
    %v625 = vsel %vm624, %v619, %v623
    %v626 = vmul.f32 %v618, %v625
    %v627 = vsub.f32 %v612, %v626
    %v628 = vmul.f32 %v627, %v627
    %v629 = vsel %vm615, %v628, 0.0
    %630 = vadd.xlane.f32.xlu0 %v629
    %v631 = vpop.xlane.xlu0 %630
    %v632 = vmul.f32 %v631, %v625
    %v633 = vadd.f32 %v632, 1e-05
    %v634 = vrsqrt.pop %v633
    %v635 = vmul.f32 %v634, %v633
    %v636 = vmul.f32 %v635, %v634
    %v637 = vmul.f32 0.5, %v636
    %v638 = vsub.f32 1.5, %v637
    %v639 = vmul.f32 %v634, %v638
    %vm640 = vweird.f32 %v633
    %vm641 = vweird.f32 %v634
    %vm642 = vmor %vm640, %vm641
    %v643 = vsel %vm642, %v634, %v639
    %v644 = vmul.f32 %v627, %v643
    %v645 = vperm.slane %v613, 0
    %v646 = vmul.f32 %v644, %v645
    %v647 = vperm.slane %v614, 0
    %v648 = vadd.f32 %v646, %v647
    %v649 = vxor.u32 %v648, 2147483648
    %v650 = vmul.f32 %v649, 1.442695
    %v651 = vpow.pop %v650
    %v652 = vadd.f32 %v651, 1.0
    %v653 = vrcp.pop %v652
    %v654 = vmul.f32 %v652, %v653
    %v655 = vsub.f32 1.0, %v654
    %v656 = vmul.f32 %v653, %v655
    %v657 = vadd.f32 %v653, %v656
    %vm658 = vweird.f32 %v652
    %vm659 = vweird.f32 %v653
    %vm660 = vmor %vm658, %vm659
    %v661 = vsel %vm660, %v653, %v657
    %v662 = vand.u32 2147483647, %v652
    %vm663 = vcmp.eq.f32.partialorder %v662, 8.507059e+37
    %v664 = vand.u32 %v652, 2147483648
    %v665 = vor.u32 1.1754944e-38, %v664
    %v666 = vsel %vm663, %v665, %v661
    %v667 = vmul.f32 1.0, %v666
    %v668 = vmul.f32 %v648, %v667
    %v670 = vsel %vm437, %v63, 0
    %v673 = vsel %vm441, %v160, 0
    %675 = vmatpush.msra.mxu0 0.0
    %676 = vmatpush.msra.mxu0 0.0
    %677 = vmatpush.msra.mxu0 0.0
    %678 = vmatpush.msra.mxu0 0.0
    %679 = vmatpush.msra.mxu0 0.0
    %680 = vmatpush.msra.mxu0 0.0
    %681 = vmatpush.msra.mxu0 0.0
    %682 = vmatpush.msra.mxu0 0.0
    %683 = vmatpush.msra.mxu0 0.0
    %684 = vmatpush.msra.mxu0 0.0
    %685 = vmatpush.msra.mxu0 0.0
    %686 = vmatpush.msra.mxu0 0.0
    %687 = vmatpush.msra.mxu0 0.0
    %688 = vmatpush.msra.mxu0 0.0
    %689 = vmatpush.msra.mxu0 0.0
    %690 = vmatpush.msra.mxu0 %v673
    %691 = vmatmul.f32.gmra.mxu0 %v670
    %v692 = vpop.f32.mrf.mxu0
    %v693 = vadd.f32 %v668, %v692
    %694 = vdwg.mxu0
    %v695 = vld [vmem:[%s13] sm:$0x1]
    %v696 = vld [vmem:[%s14] sm:$0x1]
    %v697 = vsel %vm615, %v693, 0.0
    %698 = vadd.xlane.f32.xlu0 %v697
    %v699 = vpop.xlane.xlu0 %698
    %v700 = vmul.f32 %v699, %v625
    %v701 = vsub.f32 %v693, %v700
    %v702 = vmul.f32 %v701, %v701
    %v703 = vsel %vm615, %v702, 0.0
    %704 = vadd.xlane.f32.xlu0 %v703
    %v705 = vpop.xlane.xlu0 %704
    %v706 = vmul.f32 %v705, %v625
    %v707 = vadd.f32 %v706, 1e-05
    %v708 = vrsqrt.pop %v707
    %v709 = vmul.f32 %v708, %v707
    %v710 = vmul.f32 %v709, %v708
    %v711 = vmul.f32 0.5, %v710
    %v712 = vsub.f32 1.5, %v711
    %v713 = vmul.f32 %v708, %v712
    %vm714 = vweird.f32 %v707
    %vm715 = vweird.f32 %v708
    %vm716 = vmor %vm714, %vm715
    %v717 = vsel %vm716, %v708, %v713
    %v718 = vmul.f32 %v701, %v717
    %v719 = vperm.slane %v695, 0
    %v720 = vmul.f32 %v718, %v719
    %v721 = vperm.slane %v696, 0
    %v722 = vadd.f32 %v720, %v721
    %v723 = vld [vmem:[%s7 + $0x28] sm:$0xff]
    %v724 = vld [vmem:[%s7 + $0x30] sm:$0x3]
    %v726 = vsel %vm74, %v724, 0
    %728 = vmatpush.msra.mxu0 0.0
    %729 = vmatpush.msra.mxu0 0.0
    %730 = vmatpush.msra.mxu0 0.0
    %731 = vmatpush.msra.mxu0 0.0
    %732 = vmatpush.msra.mxu0 0.0
    %733 = vmatpush.msra.mxu0 0.0
    %734 = vmatpush.msra.mxu0 0.0
    %735 = vmatpush.msra.mxu0 0.0
    %736 = vmatpush.msra.mxu0 0.0
    %737 = vmatpush.msra.mxu0 0.0
    %738 = vmatpush.msra.mxu0 0.0
    %739 = vmatpush.msra.mxu0 0.0
    %740 = vmatpush.msra.mxu0 0.0
    %741 = vmatpush.msra.mxu0 0.0
    %742 = vmatpush.msra.mxu0 %v726
    %743 = vmatpush.msra.mxu0 %v723
    %744 = vmatmul.f32.gmra.mxu0 %v72
    %v745 = vpop.f32.mrf.mxu0
    %v746 = vadd.f32 0.0, %v745
    %747 = vdwg.mxu0
    %v749 = vsel %vm70, %v746, 0
    %751 = vmatpush.msra.mxu0 0.0
    %752 = vmatpush.msra.mxu0 0.0
    %753 = vmatpush.msra.mxu0 0.0
    %754 = vmatpush.msra.mxu0 0.0
    %755 = vmatpush.msra.mxu0 0.0
    %756 = vmatpush.msra.mxu0 0.0
    %757 = vmatpush.msra.mxu0 0.0
    %758 = vmatpush.msra.mxu0 0.0
    %759 = vmatpush.msra.mxu0 0.0
    %760 = vmatpush.msra.mxu0 0.0
    %761 = vmatpush.msra.mxu0 0.0
    %762 = vmatpush.msra.mxu0 0.0
    %763 = vmatpush.msra.mxu0 0.0
    %764 = vmatpush.msra.mxu0 0.0
    %765 = vmatpush.msra.mxu0 %v102
    %766 = vmatpush.msra.mxu0 %v66
    %767 = vmatmul.f32.gmra.mxu0 %v749
    %v768 = vpop.f32.mrf.mxu0
    %v769 = vadd.f32 0.0, %v768
    %770 = vdwg.mxu0
    %v771 = vld [vmem:[%s7 + $0x32] sm:$0xff]
    %v772 = vld [vmem:[%s7 + $0x3a] sm:$0x3]
    %v774 = vsel %vm74, %v772, 0
    %776 = vmatpush.msra.mxu0 0.0
    %777 = vmatpush.msra.mxu0 0.0
    %778 = vmatpush.msra.mxu0 0.0
    %779 = vmatpush.msra.mxu0 0.0
    %780 = vmatpush.msra.mxu0 0.0
    %781 = vmatpush.msra.mxu0 0.0
    %782 = vmatpush.msra.mxu0 0.0
    %783 = vmatpush.msra.mxu0 0.0
    %784 = vmatpush.msra.mxu0 0.0
    %785 = vmatpush.msra.mxu0 0.0
    %786 = vmatpush.msra.mxu0 0.0
    %787 = vmatpush.msra.mxu0 0.0
    %788 = vmatpush.msra.mxu0 0.0
    %789 = vmatpush.msra.mxu0 0.0
    %790 = vmatpush.msra.mxu0 %v774
    %791 = vmatpush.msra.mxu0 %v771
    %792 = vmatmul.f32.gmra.mxu0 %v72
    %v793 = vpop.f32.mrf.mxu0
    %v794 = vadd.f32 0.0, %v793
    %795 = vdwg.mxu0
    %v797 = vsel %vm70, %v794, 0
    %799 = vmatpush.msra.mxu0 0.0
    %800 = vmatpush.msra.mxu0 0.0
    %801 = vmatpush.msra.mxu0 0.0
    %802 = vmatpush.msra.mxu0 0.0
    %803 = vmatpush.msra.mxu0 0.0
    %804 = vmatpush.msra.mxu0 0.0
    %805 = vmatpush.msra.mxu0 0.0
    %806 = vmatpush.msra.mxu0 0.0
    %807 = vmatpush.msra.mxu0 0.0
    %808 = vmatpush.msra.mxu0 0.0
    %809 = vmatpush.msra.mxu0 0.0
    %810 = vmatpush.msra.mxu0 0.0
    %811 = vmatpush.msra.mxu0 0.0
    %812 = vmatpush.msra.mxu0 0.0
    %813 = vmatpush.msra.mxu0 %v102
    %814 = vmatpush.msra.mxu0 %v66
    %815 = vmatmul.f32.gmra.mxu0 %v797
    %v816 = vpop.f32.mrf.mxu0
    %v817 = vadd.f32 0.0, %v816
    %818 = vdwg.mxu0
    %v819 = vld [vmem:[%s7 + $0x3c] sm:$0xff]
    %v820 = vld [vmem:[%s7 + $0x44] sm:$0x3]
    %v822 = vsel %vm74, %v820, 0
    %824 = vmatpush.msra.mxu0 0.0
    %825 = vmatpush.msra.mxu0 0.0
    %826 = vmatpush.msra.mxu0 0.0
    %827 = vmatpush.msra.mxu0 0.0
    %828 = vmatpush.msra.mxu0 0.0
    %829 = vmatpush.msra.mxu0 0.0
    %830 = vmatpush.msra.mxu0 0.0
    %831 = vmatpush.msra.mxu0 0.0
    %832 = vmatpush.msra.mxu0 0.0
    %833 = vmatpush.msra.mxu0 0.0
    %834 = vmatpush.msra.mxu0 0.0
    %835 = vmatpush.msra.mxu0 0.0
    %836 = vmatpush.msra.mxu0 0.0
    %837 = vmatpush.msra.mxu0 0.0
    %838 = vmatpush.msra.mxu0 %v822
    %839 = vmatpush.msra.mxu0 %v819
    %840 = vmatmul.f32.gmra.mxu0 %v72
    %v841 = vpop.f32.mrf.mxu0
    %v842 = vadd.f32 0.0, %v841
    %843 = vdwg.mxu0
    %v845 = vsel %vm70, %v842, 0
    %847 = vmatpush.msra.mxu0 0.0
    %848 = vmatpush.msra.mxu0 0.0
    %849 = vmatpush.msra.mxu0 0.0
    %850 = vmatpush.msra.mxu0 0.0
    %851 = vmatpush.msra.mxu0 0.0
    %852 = vmatpush.msra.mxu0 0.0
    %853 = vmatpush.msra.mxu0 0.0
    %854 = vmatpush.msra.mxu0 0.0
    %855 = vmatpush.msra.mxu0 0.0
    %856 = vmatpush.msra.mxu0 0.0
    %857 = vmatpush.msra.mxu0 0.0
    %858 = vmatpush.msra.mxu0 0.0
    %859 = vmatpush.msra.mxu0 0.0
    %860 = vmatpush.msra.mxu0 0.0
    %861 = vmatpush.msra.mxu0 %v102
    %862 = vmatpush.msra.mxu0 %v66
    %863 = vmatmul.f32.gmra.mxu0 %v845
    %v864 = vpop.f32.mrf.mxu0
    %v865 = vadd.f32 0.0, %v864
    %866 = vdwg.mxu0
    %v867 = vld [vmem:[%s7 + $0x46] sm:$0xff]
    %v868 = vld [vmem:[%s7 + $0x4e] sm:$0x3]
    %v870 = vsel %vm74, %v868, 0
    %872 = vmatpush.msra.mxu0 0.0
    %873 = vmatpush.msra.mxu0 0.0
    %874 = vmatpush.msra.mxu0 0.0
    %875 = vmatpush.msra.mxu0 0.0
    %876 = vmatpush.msra.mxu0 0.0
    %877 = vmatpush.msra.mxu0 0.0
    %878 = vmatpush.msra.mxu0 0.0
    %879 = vmatpush.msra.mxu0 0.0
    %880 = vmatpush.msra.mxu0 0.0
    %881 = vmatpush.msra.mxu0 0.0
    %882 = vmatpush.msra.mxu0 0.0
    %883 = vmatpush.msra.mxu0 0.0
    %884 = vmatpush.msra.mxu0 0.0
    %885 = vmatpush.msra.mxu0 0.0
    %886 = vmatpush.msra.mxu0 %v870
    %887 = vmatpush.msra.mxu0 %v867
    %888 = vmatmul.f32.gmra.mxu0 %v72
    %v889 = vpop.f32.mrf.mxu0
    %v890 = vadd.f32 0.0, %v889
    %891 = vdwg.mxu0
    %v893 = vsel %vm70, %v890, 0
    %895 = vmatpush.msra.mxu0 0.0
    %896 = vmatpush.msra.mxu0 0.0
    %897 = vmatpush.msra.mxu0 0.0
    %898 = vmatpush.msra.mxu0 0.0
    %899 = vmatpush.msra.mxu0 0.0
    %900 = vmatpush.msra.mxu0 0.0
    %901 = vmatpush.msra.mxu0 0.0
    %902 = vmatpush.msra.mxu0 0.0
    %903 = vmatpush.msra.mxu0 0.0
    %904 = vmatpush.msra.mxu0 0.0
    %905 = vmatpush.msra.mxu0 0.0
    %906 = vmatpush.msra.mxu0 0.0
    %907 = vmatpush.msra.mxu0 0.0
    %908 = vmatpush.msra.mxu0 0.0
    %909 = vmatpush.msra.mxu0 %v102
    %910 = vmatpush.msra.mxu0 %v66
    %911 = vmatmul.f32.gmra.mxu0 %v893
    %v912 = vpop.f32.mrf.mxu0
    %v913 = vadd.f32 0.0, %v912
    %914 = vdwg.mxu0
    %v915 = vmax.f32 %v769, %v817
    %v916 = vmax.f32 %v915, %v865
    %v917 = vmax.f32 %v916, %v913
    %v918 = vsub.f32 %v769, %v917
    %v919 = vmul.f32 %v918, 1.442695
    %v920 = vpow.pop %v919
    %v921 = vsub.f32 %v817, %v917
    %v922 = vmul.f32 %v921, 1.442695
    %v923 = vpow.pop %v922
    %v924 = vsub.f32 %v865, %v917
    %v925 = vmul.f32 %v924, 1.442695
    %v926 = vpow.pop %v925
    %v927 = vsub.f32 %v913, %v917
    %v928 = vmul.f32 %v927, 1.442695
    %v929 = vpow.pop %v928
    %v930 = vadd.f32 %v920, %v923
    %v931 = vadd.f32 %v930, %v926
    %v932 = vadd.f32 %v931, %v929
    %v933 = vrcp.pop %v932
    %v934 = vmul.f32 %v139, %v933
    %v935 = vmul.f32 %v920, %v934
    %v937 = vsel %vm140, %v935, 0
    %939 = vmatpush.msra.mxu0 0.0
    %940 = vmatpush.msra.mxu0 0.0
    %941 = vmatpush.msra.mxu0 0.0
    %942 = vmatpush.msra.mxu0 0.0
    %943 = vmatpush.msra.mxu0 0.0
    %944 = vmatpush.msra.mxu0 0.0
    %945 = vmatpush.msra.mxu0 0.0
    %946 = vmatpush.msra.mxu0 0.0
    %947 = vmatpush.msra.mxu0 0.0
    %948 = vmatpush.msra.mxu0 0.0
    %949 = vmatpush.msra.mxu0 0.0
    %950 = vmatpush.msra.mxu0 0.0
    %951 = vmatpush.msra.mxu0 0.0
    %952 = vmatpush.msra.mxu0 0.0
    %953 = vmatpush.msra.mxu0 0.0
    %954 = vmatpush.msra.mxu0 %v63
    %955 = vmatmul.f32.gmra.mxu0 %v937
    %v956 = vpop.f32.mrf.mxu0
    %v957 = vadd.f32 0.0, %v956
    %958 = vdwg.mxu0
    %960 = vset.pattern.permute.xlu0 3
    %961 = vperm.xlu0 %960, %v957
    %v962 = vpop.permute.xlu0 %961
    %v964 = vmul.f32 %v64, %v962
    %v965 = vsub.f32 %v957, %v964
    %v966 = vld [vmem:[%s9 + $0x10] sm:$0xf]
    %v967 = vmul.f32 %v923, %v934
    %v969 = vsel %vm140, %v967, 0
    %971 = vmatpush.msra.mxu0 0.0
    %972 = vmatpush.msra.mxu0 0.0
    %973 = vmatpush.msra.mxu0 0.0
    %974 = vmatpush.msra.mxu0 0.0
    %975 = vmatpush.msra.mxu0 0.0
    %976 = vmatpush.msra.mxu0 0.0
    %977 = vmatpush.msra.mxu0 0.0
    %978 = vmatpush.msra.mxu0 0.0
    %979 = vmatpush.msra.mxu0 0.0
    %980 = vmatpush.msra.mxu0 0.0
    %981 = vmatpush.msra.mxu0 0.0
    %982 = vmatpush.msra.mxu0 0.0
    %983 = vmatpush.msra.mxu0 0.0
    %984 = vmatpush.msra.mxu0 0.0
    %985 = vmatpush.msra.mxu0 0.0
    %986 = vmatpush.msra.mxu0 %v63
    %987 = vmatmul.f32.gmra.mxu0 %v969
    %v988 = vpop.f32.mrf.mxu0
    %v989 = vadd.f32 0.0, %v988
    %990 = vdwg.mxu0
    %992 = vset.pattern.permute.xlu0 3
    %993 = vperm.xlu0 %992, %v989
    %v994 = vpop.permute.xlu0 %993
    %v996 = vmul.f32 %v64, %v994
    %v997 = vsub.f32 %v989, %v996
    %v998 = vld [vmem:[%s9 + $0x14] sm:$0xf]
    %v1000 = vsel %vm437, %v997, 0
    %v1003 = vsel %vm441, %v998, 0
    %1005 = vmatpush.msra.mxu0 0.0
    %1006 = vmatpush.msra.mxu0 0.0
    %1007 = vmatpush.msra.mxu0 0.0
    %1008 = vmatpush.msra.mxu0 0.0
    %1009 = vmatpush.msra.mxu0 0.0
    %1010 = vmatpush.msra.mxu0 0.0
    %1011 = vmatpush.msra.mxu0 0.0
    %1012 = vmatpush.msra.mxu0 0.0
    %1013 = vmatpush.msra.mxu0 0.0
    %1014 = vmatpush.msra.mxu0 0.0
    %1015 = vmatpush.msra.mxu0 0.0
    %1016 = vmatpush.msra.mxu0 0.0
    %1017 = vmatpush.msra.mxu0 0.0
    %1018 = vmatpush.msra.mxu0 0.0
    %1019 = vmatpush.msra.mxu0 0.0
    %1020 = vmatpush.msra.mxu0 %v1003
    %1021 = vmatmul.f32.gmra.mxu0 %v1000
    %v1022 = vpop.f32.mrf.mxu0
    %v1023 = vadd.f32 0.0, %v1022
    %1024 = vdwg.mxu0
    %v1026 = vsel %vm437, %v965, 0
    %v1029 = vsel %vm441, %v966, 0
    %1031 = vmatpush.msra.mxu0 0.0
    %1032 = vmatpush.msra.mxu0 0.0
    %1033 = vmatpush.msra.mxu0 0.0
    %1034 = vmatpush.msra.mxu0 0.0
    %1035 = vmatpush.msra.mxu0 0.0
    %1036 = vmatpush.msra.mxu0 0.0
    %1037 = vmatpush.msra.mxu0 0.0
    %1038 = vmatpush.msra.mxu0 0.0
    %1039 = vmatpush.msra.mxu0 0.0
    %1040 = vmatpush.msra.mxu0 0.0
    %1041 = vmatpush.msra.mxu0 0.0
    %1042 = vmatpush.msra.mxu0 0.0
    %1043 = vmatpush.msra.mxu0 0.0
    %1044 = vmatpush.msra.mxu0 0.0
    %1045 = vmatpush.msra.mxu0 0.0
    %1046 = vmatpush.msra.mxu0 %v1029
    %1047 = vmatmul.f32.gmra.mxu0 %v1026
    %v1048 = vpop.f32.mrf.mxu0
    %v1049 = vadd.f32 %v1023, %v1048
    %1050 = vdwg.mxu0
    %v1051 = vmul.f32 %v926, %v934
    %v1053 = vsel %vm140, %v1051, 0
    %1055 = vmatpush.msra.mxu0 0.0
    %1056 = vmatpush.msra.mxu0 0.0
    %1057 = vmatpush.msra.mxu0 0.0
    %1058 = vmatpush.msra.mxu0 0.0
    %1059 = vmatpush.msra.mxu0 0.0
    %1060 = vmatpush.msra.mxu0 0.0
    %1061 = vmatpush.msra.mxu0 0.0
    %1062 = vmatpush.msra.mxu0 0.0
    %1063 = vmatpush.msra.mxu0 0.0
    %1064 = vmatpush.msra.mxu0 0.0
    %1065 = vmatpush.msra.mxu0 0.0
    %1066 = vmatpush.msra.mxu0 0.0
    %1067 = vmatpush.msra.mxu0 0.0
    %1068 = vmatpush.msra.mxu0 0.0
    %1069 = vmatpush.msra.mxu0 0.0
    %1070 = vmatpush.msra.mxu0 %v63
    %1071 = vmatmul.f32.gmra.mxu0 %v1053
    %v1072 = vpop.f32.mrf.mxu0
    %v1073 = vadd.f32 0.0, %v1072
    %1074 = vdwg.mxu0
    %1076 = vset.pattern.permute.xlu0 3
    %1077 = vperm.xlu0 %1076, %v1073
    %v1078 = vpop.permute.xlu0 %1077
    %v1080 = vmul.f32 %v64, %v1078
    %v1081 = vsub.f32 %v1073, %v1080
    %v1082 = vld [vmem:[%s9 + $0x18] sm:$0xf]
    %v1084 = vsel %vm437, %v1081, 0
    %v1087 = vsel %vm441, %v1082, 0
    %1089 = vmatpush.msra.mxu0 0.0
    %1090 = vmatpush.msra.mxu0 0.0
    %1091 = vmatpush.msra.mxu0 0.0
    %1092 = vmatpush.msra.mxu0 0.0
    %1093 = vmatpush.msra.mxu0 0.0
    %1094 = vmatpush.msra.mxu0 0.0
    %1095 = vmatpush.msra.mxu0 0.0
    %1096 = vmatpush.msra.mxu0 0.0
    %1097 = vmatpush.msra.mxu0 0.0
    %1098 = vmatpush.msra.mxu0 0.0
    %1099 = vmatpush.msra.mxu0 0.0
    %1100 = vmatpush.msra.mxu0 0.0
    %1101 = vmatpush.msra.mxu0 0.0
    %1102 = vmatpush.msra.mxu0 0.0
    %1103 = vmatpush.msra.mxu0 0.0
    %1104 = vmatpush.msra.mxu0 %v1087
    %1105 = vmatmul.f32.gmra.mxu0 %v1084
    %v1106 = vpop.f32.mrf.mxu0
    %v1107 = vadd.f32 0.0, %v1106
    %1108 = vdwg.mxu0
    %v1109 = vadd.f32 %v1049, %v1107
    %v1110 = vmul.f32 %v929, %v934
    %v1112 = vsel %vm140, %v1110, 0
    %1114 = vmatpush.msra.mxu0 0.0
    %1115 = vmatpush.msra.mxu0 0.0
    %1116 = vmatpush.msra.mxu0 0.0
    %1117 = vmatpush.msra.mxu0 0.0
    %1118 = vmatpush.msra.mxu0 0.0
    %1119 = vmatpush.msra.mxu0 0.0
    %1120 = vmatpush.msra.mxu0 0.0
    %1121 = vmatpush.msra.mxu0 0.0
    %1122 = vmatpush.msra.mxu0 0.0
    %1123 = vmatpush.msra.mxu0 0.0
    %1124 = vmatpush.msra.mxu0 0.0
    %1125 = vmatpush.msra.mxu0 0.0
    %1126 = vmatpush.msra.mxu0 0.0
    %1127 = vmatpush.msra.mxu0 0.0
    %1128 = vmatpush.msra.mxu0 0.0
    %1129 = vmatpush.msra.mxu0 %v63
    %1130 = vmatmul.f32.gmra.mxu0 %v1112
    %v1131 = vpop.f32.mrf.mxu0
    %v1132 = vadd.f32 0.0, %v1131
    %1133 = vdwg.mxu0
    %1135 = vset.pattern.permute.xlu0 3
    %1136 = vperm.xlu0 %1135, %v1132
    %v1137 = vpop.permute.xlu0 %1136
    %v1139 = vmul.f32 %v64, %v1137
    %v1140 = vsub.f32 %v1132, %v1139
    %v1141 = vld [vmem:[%s9 + $0x1c] sm:$0xf]
    %v1143 = vsel %vm437, %v1140, 0
    %v1146 = vsel %vm441, %v1141, 0
    %1148 = vmatpush.msra.mxu0 0.0
    %1149 = vmatpush.msra.mxu0 0.0
    %1150 = vmatpush.msra.mxu0 0.0
    %1151 = vmatpush.msra.mxu0 0.0
    %1152 = vmatpush.msra.mxu0 0.0
    %1153 = vmatpush.msra.mxu0 0.0
    %1154 = vmatpush.msra.mxu0 0.0
    %1155 = vmatpush.msra.mxu0 0.0
    %1156 = vmatpush.msra.mxu0 0.0
    %1157 = vmatpush.msra.mxu0 0.0
    %1158 = vmatpush.msra.mxu0 0.0
    %1159 = vmatpush.msra.mxu0 0.0
    %1160 = vmatpush.msra.mxu0 0.0
    %1161 = vmatpush.msra.mxu0 0.0
    %1162 = vmatpush.msra.mxu0 0.0
    %1163 = vmatpush.msra.mxu0 %v1146
    %1164 = vmatmul.f32.gmra.mxu0 %v1143
    %v1165 = vpop.f32.mrf.mxu0
    %v1166 = vadd.f32 0.0, %v1165
    %1167 = vdwg.mxu0
    %v1168 = vadd.f32 %v1109, %v1166
    %v1169 = vmul.f32 %v1168, %v159
    %v1170 = vld [vmem:[%s10 + $0x1] sm:$0x1]
    %v1171 = vperm.slane %v1170, 0
    %v1172 = vadd.f32 %v1169, %v1171
    %v1173 = vld [vmem:[%s11 + $0x1] sm:$0x1]
    %v1174 = vld [vmem:[%s12 + $0x1] sm:$0x1]
    %v1175 = vsel %vm615, %v1172, 0.0
    %1176 = vadd.xlane.f32.xlu0 %v1175
    %v1177 = vpop.xlane.xlu0 %1176
    %v1178 = vmul.f32 %v1177, %v625
    %v1179 = vsub.f32 %v1172, %v1178
    %v1180 = vmul.f32 %v1179, %v1179
    %v1181 = vsel %vm615, %v1180, 0.0
    %1182 = vadd.xlane.f32.xlu0 %v1181
    %v1183 = vpop.xlane.xlu0 %1182
    %v1184 = vmul.f32 %v1183, %v625
    %v1185 = vadd.f32 %v1184, 1e-05
    %v1186 = vrsqrt.pop %v1185
    %v1187 = vmul.f32 %v1186, %v1185
    %v1188 = vmul.f32 %v1187, %v1186
    %v1189 = vmul.f32 0.5, %v1188
    %v1190 = vsub.f32 1.5, %v1189
    %v1191 = vmul.f32 %v1186, %v1190
    %vm1192 = vweird.f32 %v1185
    %vm1193 = vweird.f32 %v1186
    %vm1194 = vmor %vm1192, %vm1193
    %v1195 = vsel %vm1194, %v1186, %v1191
    %v1196 = vmul.f32 %v1179, %v1195
    %v1197 = vperm.slane %v1173, 0
    %v1198 = vmul.f32 %v1196, %v1197
    %v1199 = vperm.slane %v1174, 0
    %v1200 = vadd.f32 %v1198, %v1199
    %v1201 = vxor.u32 %v1200, 2147483648
    %v1202 = vmul.f32 %v1201, 1.442695
    %v1203 = vpow.pop %v1202
    %v1204 = vadd.f32 %v1203, 1.0
    %v1205 = vrcp.pop %v1204
    %v1206 = vmul.f32 %v1204, %v1205
    %v1207 = vsub.f32 1.0, %v1206
    %v1208 = vmul.f32 %v1205, %v1207
    %v1209 = vadd.f32 %v1205, %v1208
    %vm1210 = vweird.f32 %v1204
    %vm1211 = vweird.f32 %v1205
    %vm1212 = vmor %vm1210, %vm1211
    %v1213 = vsel %vm1212, %v1205, %v1209
    %v1214 = vand.u32 2147483647, %v1204
    %vm1215 = vcmp.eq.f32.partialorder %v1214, 8.507059e+37
    %v1216 = vand.u32 %v1204, 2147483648
    %v1217 = vor.u32 1.1754944e-38, %v1216
    %v1218 = vsel %vm1215, %v1217, %v1213
    %v1219 = vmul.f32 1.0, %v1218
    %v1220 = vmul.f32 %v1200, %v1219
    %v1221 = vadd.f32 %v722, %v1220
    %v1222 = vld [vmem:[%s13 + $0x1] sm:$0x1]
    %v1223 = vld [vmem:[%s14 + $0x1] sm:$0x1]
    %v1224 = vsel %vm615, %v1221, 0.0
    %1225 = vadd.xlane.f32.xlu0 %v1224
    %v1226 = vpop.xlane.xlu0 %1225
    %v1227 = vmul.f32 %v1226, %v625
    %v1228 = vsub.f32 %v1221, %v1227
    %v1229 = vmul.f32 %v1228, %v1228
    %v1230 = vsel %vm615, %v1229, 0.0
    %1231 = vadd.xlane.f32.xlu0 %v1230
    %v1232 = vpop.xlane.xlu0 %1231
    %v1233 = vmul.f32 %v1232, %v625
    %v1234 = vadd.f32 %v1233, 1e-05
    %v1235 = vrsqrt.pop %v1234
    %v1236 = vmul.f32 %v1235, %v1234
    %v1237 = vmul.f32 %v1236, %v1235
    %v1238 = vmul.f32 0.5, %v1237
    %v1239 = vsub.f32 1.5, %v1238
    %v1240 = vmul.f32 %v1235, %v1239
    %vm1241 = vweird.f32 %v1234
    %vm1242 = vweird.f32 %v1235
    %vm1243 = vmor %vm1241, %vm1242
    %v1244 = vsel %vm1243, %v1235, %v1240
    %v1245 = vmul.f32 %v1228, %v1244
    %v1246 = vperm.slane %v1222, 0
    %v1247 = vmul.f32 %v1245, %v1246
    %v1248 = vperm.slane %v1223, 0
    %v1249 = vadd.f32 %v1247, %v1248
    %vm1250 = vcmp.eq.s32.totalorder %v132, %v129
    %v1251 = vsel %vm1250, 1.0, 0.0
    %v1253 = vsel %vm140, %v1251, 0
    %1255 = vmatpush.msra.mxu0 0.0
    %1256 = vmatpush.msra.mxu0 0.0
    %1257 = vmatpush.msra.mxu0 0.0
    %1258 = vmatpush.msra.mxu0 0.0
    %1259 = vmatpush.msra.mxu0 0.0
    %1260 = vmatpush.msra.mxu0 0.0
    %1261 = vmatpush.msra.mxu0 0.0
    %1262 = vmatpush.msra.mxu0 0.0
    %1263 = vmatpush.msra.mxu0 0.0
    %1264 = vmatpush.msra.mxu0 0.0
    %1265 = vmatpush.msra.mxu0 0.0
    %1266 = vmatpush.msra.mxu0 0.0
    %1267 = vmatpush.msra.mxu0 0.0
    %1268 = vmatpush.msra.mxu0 0.0
    %1269 = vmatpush.msra.mxu0 0.0
    %1270 = vmatpush.msra.mxu0 %v1249
    %1271 = vmatmul.f32.gmra.mxu0 %v1253
    %v1272 = vpop.f32.mrf.mxu0
    %v1273 = vadd.f32 0.0, %v1272
    %1274 = vdwg.mxu0
    %vm1275 = vcmask 58368
    %v1276 = vsel %vm1275, %v1251, 0.0
    %1277 = vadd.xlane.f32.xlu0 %v1276
    %v1278 = vpop.xlane.xlu0 %1277
    %v1279 = vmax.f32 %v1278, 1.0
    %v1280 = vrcp.pop %v1279
    %v1281 = vmul.f32 %v1279, %v1280
    %v1282 = vsub.f32 1.0, %v1281
    %v1283 = vmul.f32 %v1280, %v1282
    %v1284 = vadd.f32 %v1280, %v1283
    %vm1285 = vweird.f32 %v1279
    %vm1286 = vweird.f32 %v1280
    %vm1287 = vmor %vm1285, %vm1286
    %v1288 = vsel %vm1287, %v1280, %v1284
    %v1289 = vand.u32 2147483647, %v1279
    %vm1290 = vcmp.eq.f32.partialorder %v1289, 8.507059e+37
    %v1291 = vand.u32 %v1279, 2147483648
    %v1292 = vor.u32 1.1754944e-38, %v1291
    %v1293 = vsel %vm1290, %v1292, %v1288
    %v1294 = vmul.f32 %v1273, %v1293
    %v1295 = vld [vmem:[%s15] sm:$0xff]
    %v1296 = vld [vmem:[%s15 + $0x8] sm:$0xff]
    %v1297 = vld [vmem:[%s15 + $0x10] sm:$0xff]
    %v1298 = vld [vmem:[%s15 + $0x18] sm:$0xff]
    %v1299 = vld [vmem:[%s16] sm:$0x1]
    %v1301 = vperm.slane %v1299, 0
    %v1304 = vsel %vm615, %v1294, 0
    %1306 = vmatpush.msra.mxu0 0.0
    %1307 = vmatpush.msra.mxu0 0.0
    %1308 = vmatpush.msra.mxu0 0.0
    %1309 = vmatpush.msra.mxu0 0.0
    %1310 = vmatpush.msra.mxu0 0.0
    %1311 = vmatpush.msra.mxu0 0.0
    %1312 = vmatpush.msra.mxu0 0.0
    %1313 = vmatpush.msra.mxu0 0.0
    %1314 = vmatpush.msra.mxu0 0.0
    %1315 = vmatpush.msra.mxu0 0.0
    %1316 = vmatpush.msra.mxu0 0.0
    %1317 = vmatpush.msra.mxu0 0.0
    %1318 = vmatpush.msra.mxu0 %v1298
    %1319 = vmatpush.msra.mxu0 %v1297
    %1320 = vmatpush.msra.mxu0 %v1296
    %1321 = vmatpush.msra.mxu0 %v1295
    %1322 = vmatmul.f32.gmra.mxu0 %v1304
    %v1323 = vpop.f32.mrf.mxu0
    %v1324 = vadd.f32 %v1301, %v1323
    %1325 = vdwg.mxu0
    %v1326 = vxor.u32 %v1324, 2147483648
    %v1327 = vmul.f32 %v1326, 1.442695
    %v1328 = vpow.pop %v1327
    %v1329 = vadd.f32 %v1328, 1.0
    %v1330 = vrcp.pop %v1329
    %v1331 = vmul.f32 %v1329, %v1330
    %v1332 = vsub.f32 1.0, %v1331
    %v1333 = vmul.f32 %v1330, %v1332
    %v1334 = vadd.f32 %v1330, %v1333
    %vm1335 = vweird.f32 %v1329
    %vm1336 = vweird.f32 %v1330
    %vm1337 = vmor %vm1335, %vm1336
    %v1338 = vsel %vm1337, %v1330, %v1334
    %v1339 = vand.u32 2147483647, %v1329
    %vm1340 = vcmp.eq.f32.partialorder %v1339, 8.507059e+37
    %v1341 = vand.u32 %v1329, 2147483648
    %v1342 = vor.u32 1.1754944e-38, %v1341
    %v1343 = vsel %vm1340, %v1342, %v1338
    %v1344 = vmul.f32 1.0, %v1343
    %v1345 = vmul.f32 %v1324, %v1344
    %v1346 = vld [vmem:[%s17] sm:$0xff]
    %v1347 = vld [vmem:[%s17 + $0x8] sm:$0xff]
    %v1348 = vld [vmem:[%s17 + $0x10] sm:$0xff]
    %v1349 = vld [vmem:[%s17 + $0x18] sm:$0xff]
    %v1350 = vld [vmem:[%s18] sm:$0x1]
    %v1352 = vperm.slane %v1350, 0
    %v1355 = vsel %vm615, %v1345, 0
    %1357 = vmatpush.msra.mxu0 0.0
    %1358 = vmatpush.msra.mxu0 0.0
    %1359 = vmatpush.msra.mxu0 0.0
    %1360 = vmatpush.msra.mxu0 0.0
    %1361 = vmatpush.msra.mxu0 0.0
    %1362 = vmatpush.msra.mxu0 0.0
    %1363 = vmatpush.msra.mxu0 0.0
    %1364 = vmatpush.msra.mxu0 0.0
    %1365 = vmatpush.msra.mxu0 0.0
    %1366 = vmatpush.msra.mxu0 0.0
    %1367 = vmatpush.msra.mxu0 0.0
    %1368 = vmatpush.msra.mxu0 0.0
    %1369 = vmatpush.msra.mxu0 %v1349
    %1370 = vmatpush.msra.mxu0 %v1348
    %1371 = vmatpush.msra.mxu0 %v1347
    %1372 = vmatpush.msra.mxu0 %v1346
    %1373 = vmatmul.f32.gmra.mxu0 %v1355
    %v1374 = vpop.f32.mrf.mxu0
    %v1375 = vadd.f32 %v1352, %v1374
    %1376 = vdwg.mxu0
    %1377 = vst [vmem:[#allocation2] sm:$0x3] %v1375
    // Predicated region
    $region78: #{tpu_custom_call.1} parent=1 // pred_check
      _
    $region79: #{tpu_custom_call.1} parent=1 // pred_check_branch
      %1379 = sbr.rel (0) target = $region81
    $region80: #{tpu_custom_call.1} parent=1 // pred_region
      %1381 = vsyncadd [#allocation3], 0
      %s1383 = sshll.u32 [#allocation2], 4
      %s1384 = int_to_ptr.vmem [resolvable:$true] %s1383
      %s1385 = sshll.u32 %s19, 4
      %s1386 = int_to_ptr.hbm [resolvable:$true] %s1385
      %1388 = dma.vmem_to_hbm [thread:$0]  %s1384, 32, %s1386, [#allocation3]
    $region81: #{tpu_custom_call.1} parent=1 // pred_fallthru
      _
    // Predicated region
    $region82: #{tpu_custom_call.1} parent=1 // pred_check
      _
    $region83: #{tpu_custom_call.1} parent=1 // pred_check_branch
      %1390 = sbr.rel (0) target = $region85
    $region84: #{tpu_custom_call.1} parent=1 // pred_region
      %1392 = dma.done [#allocation3], 32
    $region85: #{tpu_custom_call.1} parent=1 // pred_fallthru
      _
    %1393 = vsyncpa [#allocation3], 1

</llo_original>
